<compile_context>
chip_gen: v5e
topology: v5e:2x2
jax: 0.10.0
libtpu: 0.0.40
codegen_flags: <defaults>
</compile_context>

<pallas_src>
import functools

import jax
import jax.numpy as jnp
from jax import lax
from jax.experimental import pallas as pl
from jax.experimental.pallas import tpu as pltpu


def _round_up(x, m):
    return ((x + m - 1) // m) * m


def _stable_softplus(x):
    # log(1 + exp(x)) computed stably: max(x, 0) + log1p(exp(-|x|))
    return jnp.maximum(x, 0.0) + jnp.log1p(jnp.exp(-jnp.abs(x)))


# ----------------------------------------------------------------------------
# Main path: embedding tables resident in VMEM, in-kernel row gather.
# ----------------------------------------------------------------------------
def _p2v_resident_kernel(center_ref, context_ref, neg_ref,    # scalar-prefetch (SMEM)
                         wi_ref, wo_ref,                      # VMEM-resident padded tables
                         out_ref,                             # (1, 8, 128) per-tile partial
                         ci_buf, po_buf, ng_buf,              # (tb//8, 8, dp) gather buffers
                         *, tb, n_neg, b_true, b_pad):
    base = pl.program_id(0) * tb
    tg = tb // 8

    # In-VMEM row gather: the tables already live in VMEM (fetched once thanks to
    # the constant index_map), so a "gather" is just tb dynamic row loads plus
    # aligned single-sublane stores — no HBM traffic, no DMA waits.
    def gather(table_ref, idx_at, dst_ref):
        @pl.loop(0, tg)
        def _(rr):
            r0 = rr * 8
            for j in range(8):                    # manual 8x unroll, static sublane j
                idx = idx_at(r0 + j)
                dst_ref[rr, pl.ds(j, 1), :] = table_ref[pl.ds(idx, 1), :]

    gather(wi_ref, lambda r: center_ref[base + r], ci_buf)
    gather(wo_ref, lambda r: context_ref[base + r], po_buf)

    wi_c = ci_buf[...].astype(jnp.float32)        # (tg, 8, dp)
    wo_p = po_buf[...].astype(jnp.float32)

    # Mask rows that are pure batch padding (they must not contribute to the loss).
    if b_true < b_pad:
        row = (base
               + 8 * lax.broadcasted_iota(jnp.int32, (tg, 8, 1), 0)
               + lax.broadcasted_iota(jnp.int32, (tg, 8, 1), 1))
        mask = (row < b_true).astype(jnp.float32)

        def msum(x):
            return jnp.sum(x * mask)
    else:
        msum = jnp.sum

    # Positive samples (target = 1): softplus(-logit).
    lp = jnp.sum(wi_c * wo_p, axis=-1, keepdims=True)         # (tg, 8, 1)
    acc = msum(_stable_softplus(-lp))

    # Negative samples (target = 0): softplus(+logit).  K is small & static.
    for k in range(n_neg):
        gather(wo_ref, lambda r, kk=k: neg_ref[kk * b_pad + base + r], ng_buf)
        wo_n = ng_buf[...].astype(jnp.float32)
        ln = jnp.sum(wi_c * wo_n, axis=-1, keepdims=True)
        acc = acc + msum(_stable_softplus(ln))

    # Lane-dense (8, 128) partial-sum block (unmasked vst); wrapper reads [0, 0].
    out_ref[...] = jnp.zeros(out_ref.shape, jnp.float32) + acc


# ----------------------------------------------------------------------------
# Fallback path: tables stay in HBM, manual row-DMA gather.
# ----------------------------------------------------------------------------
def _p2v_dma_kernel(center_ref, context_ref, neg_ref,         # scalar-prefetch (SMEM)
                    wi_hbm, wo_hbm,                           # tables in HBM (pl.ANY)
                    out_ref,                                  # (1, 8, 128) per-tile partial
                    ci_buf, po_buf, ng0_buf, ng1_buf,         # (tb, dp) gather buffers
                    sems,                                     # 4 DMA semaphores
                    *, tb, n_neg, b_true, b_pad):
    base = pl.program_id(0) * tb
    tg = tb // 8

    def start_gather(table, idx_at, dst, sem):
        # tb row DMAs on one shared byte-counting semaphore, 8x unrolled so the
        # single descriptor-issue (vector-misc) slot stays busy every bundle.
        # NOTE: for very large tb, chunk the starts to bound outstanding DMAs.
        @pl.loop(0, tg)
        def _(rr):
            r0 = rr * 8
            for j in range(8):
                r = r0 + j
                pltpu.make_async_copy(table.at[idx_at(r)], dst.at[r], sem).start()

    def wait_gather(table, dst, sem):
        # ONE wait per gather stream (was tb waits): the DMA semaphore counts
        # bytes and this descriptor's size equals the sum of the tb row copies
        # issued above, so a single wait drains the whole stream.
        pltpu.make_async_copy(table.at[pl.ds(0, tb)], dst, sem).wait()

    ng_bufs = (ng0_buf, ng1_buf)

    # Kick off all independent gather streams up front (DMAs overlap each other).
    start_gather(wi_hbm, lambda r: center_ref[base + r], ci_buf, sems.at[0])
    start_gather(wo_hbm, lambda r: context_ref[base + r], po_buf, sems.at[1])
    if n_neg > 0:
        start_gather(wo_hbm, lambda r: neg_ref[base + r], ng_bufs[0], sems.at[2])  # k = 0

    wait_gather(wi_hbm, ci_buf, sems.at[0])
    wait_gather(wo_hbm, po_buf, sems.at[1])

    wi_c = ci_buf[...].astype(jnp.float32)        # (tb, dp)
    wo_p = po_buf[...].astype(jnp.float32)

    if b_true < b_pad:
        row = base + lax.broadcasted_iota(jnp.int32, (tb, 1), 0)
        mask = (row < b_true).astype(jnp.float32)

        def msum(x):
            return jnp.sum(x * mask)
    else:
        msum = jnp.sum

    # Positive samples: target = 1  ->  softplus(-logit)
    lp = jnp.sum(wi_c * wo_p, axis=-1, keepdims=True)          # (tb, 1)
    acc = msum(_stable_softplus(-lp))

    # Negative samples: target = 0 -> softplus(+logit); double-buffered gathers.
    for k in range(n_neg):
        slot = k % 2
        wait_gather(wo_hbm, ng_bufs[slot], sems.at[2 + slot])
        if k + 1 < n_neg:  # prefetch next negative slice while computing this one
            start_gather(wo_hbm, lambda r, kk=k + 1: neg_ref[kk * b_pad + base + r],
                         ng_bufs[1 - slot], sems.at[2 + (1 - slot)])
        wo_n = ng_bufs[slot][...].astype(jnp.float32)           # (tb, dp)
        ln = jnp.sum(wi_c * wo_n, axis=-1, keepdims=True)       # (tb, 1)
        acc = acc + msum(_stable_softplus(ln))

    out_ref[...] = jnp.zeros(out_ref.shape, jnp.float32) + acc


# ----------------------------------------------------------------------------
# Wrapper
# ----------------------------------------------------------------------------
def p2v_forward(wi_weight, wo_weight, center, context, negative_samples, *,
                tb=None, force_dma_gather=False):
    """Forward pass of P2V: returns scalar mean BCE-with-logits loss (float32)."""
    n_products, d = wi_weight.shape
    b = int(center.shape[0])
    k = int(negative_samples.shape[1])
    emb_dtype = wi_weight.dtype
    itemsize = jnp.dtype(emb_dtype).itemsize

    # --- batch tiling: aim for >=2 grid steps where possible (so the "parallel"
    # axis can engage v7x's second TensorCore), tiles up to 1024 rows to
    # amortize per-grid-step overhead.
    if tb is None:
        tb = min(1024, _round_up(max((b + 1) // 2, 8), 8))
    else:
        tb = _round_up(max(int(tb), 8), 8)
    bp = _round_up(b, tb)
    nb = bp // tb

    # --- padding: D -> multiple of 128 lanes (pad lanes contribute 0 to dots);
    # rows -> multiple of 8 sublanes and >= tb so the single-wait descriptor in
    # the DMA fallback path is always in-bounds.  In a real training loop the
    # padded tables would be prepared once, not per step.
    dp = _round_up(d, 128)
    vp = max(_round_up(n_products, 8), tb)
    wi_w = jnp.pad(wi_weight, ((0, vp - n_products), (0, dp - d)))
    wo_w = jnp.pad(wo_weight, ((0, vp - n_products), (0, dp - d)))

    # --- indices: clip (bounds-safe gathers), pad batch with index 0 (a valid
    # row which is masked out of the loss inside the kernel).
    def prep_1d(x):
        x = jnp.clip(x.astype(jnp.int32).reshape(-1), 0, n_products - 1)
        return jnp.pad(x, (0, bp - b))

    center_i = prep_1d(center)                                  # (Bp,)
    context_i = prep_1d(context)                                 # (Bp,)
    if k > 0:
        neg = jnp.clip(negative_samples.astype(jnp.int32), 0, n_products - 1)
        neg_i = jnp.pad(neg.T, ((0, 0), (0, bp - b))).reshape(-1)  # (K * Bp,)
    else:
        neg_i = jnp.zeros((bp,), jnp.int32)                        # dummy, never read
    # TODO(synk): for very large batches, move the index arrays from scalar
    # prefetch to per-tile SMEM BlockSpecs to avoid SMEM pow2-padding blow-up.

    # --- path selection: keep the tables resident in VMEM when they fit.
    # BlockSpec'd inputs are double-buffered, so budget 2 copies per table.
    # 40 MiB leaves headroom on v7x (64 MiB physical VMEM); v5e/v6e (128 MiB)
    # are trivially fine.  Otherwise fall back to manual row DMAs from HBM.
    table_bytes = vp * dp * itemsize
    buf_bytes = tb * dp * itemsize
    resident_need = 2 * 2 * table_bytes + 3 * buf_bytes
    use_resident = (not force_dma_gather) and resident_need <= 40 * 1024 * 1024

    if use_resident:
        kernel = functools.partial(_p2v_resident_kernel,
                                   tb=tb, n_neg=k, b_true=b, b_pad=bp)
        # Constant index_map -> the table block is DMA'd into VMEM once and
        # stays resident across all grid steps (per core).
        table_spec = pl.BlockSpec((vp, dp), lambda i, *_: (0, 0))
        in_specs = [table_spec, table_spec]
        scratch = [pltpu.VMEM((tb // 8, 8, dp), emb_dtype),   # gathered center rows
                   pltpu.VMEM((tb // 8, 8, dp), emb_dtype),   # gathered positive rows
                   pltpu.VMEM((tb // 8, 8, dp), emb_dtype)]   # gathered negative rows
        vmem_need = resident_need
    else:
        kernel = functools.partial(_p2v_dma_kernel,
                                   tb=tb, n_neg=k, b_true=b, b_pad=bp)
        in_specs = [pl.BlockSpec(memory_space=pl.ANY),        # wi table stays in HBM
                    pl.BlockSpec(memory_space=pl.ANY)]        # wo table stays in HBM
        scratch = [pltpu.VMEM((tb, dp), emb_dtype),           # gathered center rows
                   pltpu.VMEM((tb, dp), emb_dtype),           # gathered positive rows
                   pltpu.VMEM((tb, dp), emb_dtype),           # negatives, slot 0
                   pltpu.VMEM((tb, dp), emb_dtype),           # negatives, slot 1
                   pltpu.SemaphoreType.DMA((4,))]
        vmem_need = 4 * buf_bytes

    # Explicit scoped-VMEM limit, capped below v7x's 64 MiB physical VMEM.
    vmem_limit = int(min(max(vmem_need + (4 << 20), 32 << 20), 48 << 20))

    partials = pl.pallas_call(
        kernel,
        out_shape=jax.ShapeDtypeStruct((nb, 8, 128), jnp.float32),
        grid_spec=pltpu.PrefetchScalarGridSpec(
            num_scalar_prefetch=3,                  # center, context, negatives
            grid=(nb,),
            in_specs=in_specs,
            out_specs=pl.BlockSpec((1, 8, 128), lambda i, *_: (i, 0, 0)),
            scratch_shapes=scratch,
        ),
        compiler_params=pltpu.CompilerParams(
            # independent per-tile partials -> parallel axis (both TCs on v7x)
            dimension_semantics=("parallel",),
            vmem_limit_bytes=vmem_limit,
        ),
    )(center_i, context_i, neg_i, wi_w, wo_w)

    n_samples = b * (k + 1)
    return jnp.sum(partials[:, 0, 0]) / jnp.float32(n_samples)


def _reference_forward(wi_weight, wo_weight, center, context, negative_samples):
    """Pure-JAX reference mirroring the PyTorch module, for sanity checking."""
    wi_c = jnp.take(wi_weight, center, axis=0)
    wo_p = jnp.take(wo_weight, context, axis=0)
    wo_n = jnp.take(wo_weight, negative_samples, axis=0)
    lp = jnp.einsum('ij,ij->i', wi_c, wo_p)
    ln = jnp.einsum('ik,ijk->ij', wi_c, wo_n)
    loss_p = jnp.sum(jnp.maximum(-lp, 0.0) + jnp.log1p(jnp.exp(-jnp.abs(lp))))
    loss_n = jnp.sum(jnp.maximum(ln, 0.0) + jnp.log1p(jnp.exp(-jnp.abs(ln))))
    n_samples = lp.shape[0] * (ln.shape[1] + 1)
    return (loss_p + loss_n) / n_samples


if __name__ == "__main__":
    # Small, deterministic setup consistent with the module's __init__/forward.
    n_products = 64
    size = 32          # embedding dim D (padded to 128 lanes inside the wrapper)
    batch = 20         # B (pads to 2 tiles of 16 -> exercises masking + 2 grid steps)
    n_neg = 4          # K negative samples per center

    key = jax.random.PRNGKey(0)
    k_wi, k_wo, k_c, k_ctx, k_neg = jax.random.split(key, 5)

    # Embedding tables, uniform in [-0.025, 0.025] as in the PyTorch init.
    wi_weight = jax.random.uniform(
        k_wi, (n_products, size), jnp.float32, minval=-0.025, maxval=0.025)
    wo_weight = jax.random.uniform(
        k_wo, (n_products, size), jnp.float32, minval=-0.025, maxval=0.025)

    center = jax.random.randint(k_c, (batch,), 0, n_products, jnp.int32)
    context = jax.random.randint(k_ctx, (batch,), 0, n_products, jnp.int32)
    negative_samples = jax.random.randint(
        k_neg, (batch, n_neg), 0, n_products, jnp.int32)

    ref = _reference_forward(wi_weight, wo_weight, center, context, negative_samples)
    jax.block_until_ready(ref)

    # Main path: tables resident in VMEM, in-kernel row gather.
    loss = p2v_forward(wi_weight, wo_weight, center, context, negative_samples)
    # Fallback path: manual row-DMA gather from HBM (used when tables don't fit VMEM).
    loss_dma = p2v_forward(wi_weight, wo_weight, center, context, negative_samples,
                           force_dma_gather=True)
    jax.block_until_ready((loss, loss_dma))

    assert jnp.allclose(loss, ref, rtol=1e-5, atol=1e-5), (loss, ref)
    assert jnp.allclose(loss_dma, ref, rtol=1e-5, atol=1e-5), (loss_dma, ref)

    print("KERNEL_OK")
</pallas_src>

<mosaic_0001>
module attributes {stable_mosaic.version = 11 : i64} {
  func.func @_p2v_resident_kernel(%arg0: i32, %arg1: memref<32xi32, #tpu.memory_space<smem>>, %arg2: memref<32xi32, #tpu.memory_space<smem>>, %arg3: memref<128xi32, #tpu.memory_space<smem>>, %arg4: memref<64x128xf32, #tpu.memory_space<vmem>>, %arg5: memref<64x128xf32, #tpu.memory_space<vmem>>, %arg6: memref<1x8x128xf32, #tpu.memory_space<vmem>>, %arg7: memref<2x8x128xf32, #tpu.memory_space<vmem>>, %arg8: memref<2x8x128xf32, #tpu.memory_space<vmem>>, %arg9: memref<2x8x128xf32, #tpu.memory_space<vmem>>) attributes {dimension_semantics = [#tpu.dimension_semantics<parallel>], iteration_bounds = array<i64: 2>, scalar_prefetch = 3 : i64, scratch_operands = 3 : i64, tpu.core_type = #tpu.core_type<tc>, window_params = [{pipeline_mode = #tpu.pipeline_mode<synchronous>, transform_indices = @transform_0, window_bounds = array<i64: 64, 128>}, {pipeline_mode = #tpu.pipeline_mode<synchronous>, transform_indices = @transform_1, window_bounds = array<i64: 64, 128>}, {transform_indices = @transform_2, window_bounds = array<i64: 1, 8, 128>}]} {
    %c16_i32 = arith.constant 16 : i32
    %0 = arith.muli %arg0, %c16_i32 : i32
    %c0_i32 = arith.constant 0 : i32
    %c2_i32 = arith.constant 2 : i32
    %1 = arith.addi %c0_i32, %c2_i32 : i32
    %c1_i32 = arith.constant 1 : i32
    scf.for %arg10 = %c0_i32 to %1 step %c1_i32  : i32 {
      %c1_i32_62 = arith.constant 1 : i32
      %114 = arith.muli %arg10, %c1_i32_62 : i32
      %c0_i32_63 = arith.constant 0 : i32
      %115 = arith.addi %c0_i32_63, %114 : i32
      %c8_i32_64 = arith.constant 8 : i32
      %116 = arith.muli %115, %c8_i32_64 : i32
      %c0_i32_65 = arith.constant 0 : i32
      %117 = arith.addi %116, %c0_i32_65 : i32
      %118 = arith.addi %0, %117 : i32
      %119 = arith.index_cast %118 : i32 to index
      %120 = memref.load %arg1[%119] : memref<32xi32, #tpu.memory_space<smem>>
      %121 = arith.index_cast %120 : i32 to index
      %c0_66 = arith.constant 0 : index
      %122 = vector.load %arg4[%121, %c0_66] : memref<64x128xf32, #tpu.memory_space<vmem>>, vector<1x128xf32>
      %123 = arith.index_cast %115 : i32 to index
      %c0_67 = arith.constant 0 : index
      %c0_68 = arith.constant 0 : index
      %124 = vector.load %arg7[%123, %c0_67, %c0_68] : memref<2x8x128xf32, #tpu.memory_space<vmem>>, vector<1x1x128xf32>
      %125 = vector.shape_cast %124 : vector<1x1x128xf32> to vector<1x128xf32>
      %126 = vector.shape_cast %122 : vector<1x128xf32> to vector<1x1x128xf32>
      tpu.vector_store %arg7[%123, %c0_67, %c0_68], %126 {strides = array<i32>} : memref<2x8x128xf32, #tpu.memory_space<vmem>>, vector<1x1x128xf32>,
      %c1_i32_69 = arith.constant 1 : i32
      %127 = arith.addi %116, %c1_i32_69 : i32
      %128 = arith.addi %0, %127 : i32
      %129 = arith.index_cast %128 : i32 to index
      %130 = memref.load %arg1[%129] : memref<32xi32, #tpu.memory_space<smem>>
      %131 = arith.index_cast %130 : i32 to index
      %c0_70 = arith.constant 0 : index
      %132 = vector.load %arg4[%131, %c0_70] : memref<64x128xf32, #tpu.memory_space<vmem>>, vector<1x128xf32>
      %133 = arith.index_cast %115 : i32 to index
      %c1 = arith.constant 1 : index
      %c0_71 = arith.constant 0 : index
      %134 = vector.load %arg7[%133, %c1, %c0_71] : memref<2x8x128xf32, #tpu.memory_space<vmem>>, vector<1x1x128xf32>
      %135 = vector.shape_cast %134 : vector<1x1x128xf32> to vector<1x128xf32>
      %136 = vector.shape_cast %132 : vector<1x128xf32> to vector<1x1x128xf32>
      tpu.vector_store %arg7[%133, %c1, %c0_71], %136 {strides = array<i32>} : memref<2x8x128xf32, #tpu.memory_space<vmem>>, vector<1x1x128xf32>,
      %c2_i32_72 = arith.constant 2 : i32
      %137 = arith.addi %116, %c2_i32_72 : i32
      %138 = arith.addi %0, %137 : i32
      %139 = arith.index_cast %138 : i32 to index
      %140 = memref.load %arg1[%139] : memref<32xi32, #tpu.memory_space<smem>>
      %141 = arith.index_cast %140 : i32 to index
      %c0_73 = arith.constant 0 : index
      %142 = vector.load %arg4[%141, %c0_73] : memref<64x128xf32, #tpu.memory_space<vmem>>, vector<1x128xf32>
      %143 = arith.index_cast %115 : i32 to index
      %c2 = arith.constant 2 : index
      %c0_74 = arith.constant 0 : index
      %144 = vector.load %arg7[%143, %c2, %c0_74] : memref<2x8x128xf32, #tpu.memory_space<vmem>>, vector<1x1x128xf32>
      %145 = vector.shape_cast %144 : vector<1x1x128xf32> to vector<1x128xf32>
      %146 = vector.shape_cast %142 : vector<1x128xf32> to vector<1x1x128xf32>
      tpu.vector_store %arg7[%143, %c2, %c0_74], %146 {strides = array<i32>} : memref<2x8x128xf32, #tpu.memory_space<vmem>>, vector<1x1x128xf32>,
      %c3_i32 = arith.constant 3 : i32
      %147 = arith.addi %116, %c3_i32 : i32
      %148 = arith.addi %0, %147 : i32
      %149 = arith.index_cast %148 : i32 to index
      %150 = memref.load %arg1[%149] : memref<32xi32, #tpu.memory_space<smem>>
      %151 = arith.index_cast %150 : i32 to index
      %c0_75 = arith.constant 0 : index
      %152 = vector.load %arg4[%151, %c0_75] : memref<64x128xf32, #tpu.memory_space<vmem>>, vector<1x128xf32>
      %153 = arith.index_cast %115 : i32 to index
      %c3 = arith.constant 3 : index
      %c0_76 = arith.constant 0 : index
      %154 = vector.load %arg7[%153, %c3, %c0_76] : memref<2x8x128xf32, #tpu.memory_space<vmem>>, vector<1x1x128xf32>
      %155 = vector.shape_cast %154 : vector<1x1x128xf32> to vector<1x128xf32>
      %156 = vector.shape_cast %152 : vector<1x128xf32> to vector<1x1x128xf32>
      tpu.vector_store %arg7[%153, %c3, %c0_76], %156 {strides = array<i32>} : memref<2x8x128xf32, #tpu.memory_space<vmem>>, vector<1x1x128xf32>,
      %c4_i32 = arith.constant 4 : i32
      %157 = arith.addi %116, %c4_i32 : i32
      %158 = arith.addi %0, %157 : i32
      %159 = arith.index_cast %158 : i32 to index
      %160 = memref.load %arg1[%159] : memref<32xi32, #tpu.memory_space<smem>>
      %161 = arith.index_cast %160 : i32 to index
      %c0_77 = arith.constant 0 : index
      %162 = vector.load %arg4[%161, %c0_77] : memref<64x128xf32, #tpu.memory_space<vmem>>, vector<1x128xf32>
      %163 = arith.index_cast %115 : i32 to index
      %c4 = arith.constant 4 : index
      %c0_78 = arith.constant 0 : index
      %164 = vector.load %arg7[%163, %c4, %c0_78] : memref<2x8x128xf32, #tpu.memory_space<vmem>>, vector<1x1x128xf32>
      %165 = vector.shape_cast %164 : vector<1x1x128xf32> to vector<1x128xf32>
      %166 = vector.shape_cast %162 : vector<1x128xf32> to vector<1x1x128xf32>
      tpu.vector_store %arg7[%163, %c4, %c0_78], %166 {strides = array<i32>} : memref<2x8x128xf32, #tpu.memory_space<vmem>>, vector<1x1x128xf32>,
      %c5_i32 = arith.constant 5 : i32
      %167 = arith.addi %116, %c5_i32 : i32
      %168 = arith.addi %0, %167 : i32
      %169 = arith.index_cast %168 : i32 to index
      %170 = memref.load %arg1[%169] : memref<32xi32, #tpu.memory_space<smem>>
      %171 = arith.index_cast %170 : i32 to index
      %c0_79 = arith.constant 0 : index
      %172 = vector.load %arg4[%171, %c0_79] : memref<64x128xf32, #tpu.memory_space<vmem>>, vector<1x128xf32>
      %173 = arith.index_cast %115 : i32 to index
      %c5 = arith.constant 5 : index
      %c0_80 = arith.constant 0 : index
      %174 = vector.load %arg7[%173, %c5, %c0_80] : memref<2x8x128xf32, #tpu.memory_space<vmem>>, vector<1x1x128xf32>
      %175 = vector.shape_cast %174 : vector<1x1x128xf32> to vector<1x128xf32>
      %176 = vector.shape_cast %172 : vector<1x128xf32> to vector<1x1x128xf32>
      tpu.vector_store %arg7[%173, %c5, %c0_80], %176 {strides = array<i32>} : memref<2x8x128xf32, #tpu.memory_space<vmem>>, vector<1x1x128xf32>,
      %c6_i32 = arith.constant 6 : i32
      %177 = arith.addi %116, %c6_i32 : i32
      %178 = arith.addi %0, %177 : i32
      %179 = arith.index_cast %178 : i32 to index
      %180 = memref.load %arg1[%179] : memref<32xi32, #tpu.memory_space<smem>>
      %181 = arith.index_cast %180 : i32 to index
      %c0_81 = arith.constant 0 : index
      %182 = vector.load %arg4[%181, %c0_81] : memref<64x128xf32, #tpu.memory_space<vmem>>, vector<1x128xf32>
      %183 = arith.index_cast %115 : i32 to index
      %c6 = arith.constant 6 : index
      %c0_82 = arith.constant 0 : index
      %184 = vector.load %arg7[%183, %c6, %c0_82] : memref<2x8x128xf32, #tpu.memory_space<vmem>>, vector<1x1x128xf32>
      %185 = vector.shape_cast %184 : vector<1x1x128xf32> to vector<1x128xf32>
      %186 = vector.shape_cast %182 : vector<1x128xf32> to vector<1x1x128xf32>
      tpu.vector_store %arg7[%183, %c6, %c0_82], %186 {strides = array<i32>} : memref<2x8x128xf32, #tpu.memory_space<vmem>>, vector<1x1x128xf32>,
      %c7_i32 = arith.constant 7 : i32
      %187 = arith.addi %116, %c7_i32 : i32
      %188 = arith.addi %0, %187 : i32
      %189 = arith.index_cast %188 : i32 to index
      %190 = memref.load %arg1[%189] : memref<32xi32, #tpu.memory_space<smem>>
      %191 = arith.index_cast %190 : i32 to index
      %c0_83 = arith.constant 0 : index
      %192 = vector.load %arg4[%191, %c0_83] : memref<64x128xf32, #tpu.memory_space<vmem>>, vector<1x128xf32>
      %193 = arith.index_cast %115 : i32 to index
      %c7 = arith.constant 7 : index
      %c0_84 = arith.constant 0 : index
      %194 = vector.load %arg7[%193, %c7, %c0_84] : memref<2x8x128xf32, #tpu.memory_space<vmem>>, vector<1x1x128xf32>
      %195 = vector.shape_cast %194 : vector<1x1x128xf32> to vector<1x128xf32>
      %196 = vector.shape_cast %192 : vector<1x128xf32> to vector<1x1x128xf32>
      tpu.vector_store %arg7[%193, %c7, %c0_84], %196 {strides = array<i32>} : memref<2x8x128xf32, #tpu.memory_space<vmem>>, vector<1x1x128xf32>,
    }
    %c2_i32_0 = arith.constant 2 : i32
    %c0_i32_1 = arith.constant 0 : i32
    %c2_i32_2 = arith.constant 2 : i32
    %2 = arith.addi %c0_i32_1, %c2_i32_2 : i32
    %c1_i32_3 = arith.constant 1 : i32
    scf.for %arg10 = %c0_i32_1 to %2 step %c1_i32_3  : i32 {
      %c1_i32_62 = arith.constant 1 : i32
      %114 = arith.muli %arg10, %c1_i32_62 : i32
      %c0_i32_63 = arith.constant 0 : i32
      %115 = arith.addi %c0_i32_63, %114 : i32
      %c8_i32_64 = arith.constant 8 : i32
      %116 = arith.muli %115, %c8_i32_64 : i32
      %c0_i32_65 = arith.constant 0 : i32
      %117 = arith.addi %116, %c0_i32_65 : i32
      %118 = arith.addi %0, %117 : i32
      %119 = arith.index_cast %118 : i32 to index
      %120 = memref.load %arg2[%119] : memref<32xi32, #tpu.memory_space<smem>>
      %121 = arith.index_cast %120 : i32 to index
      %c0_66 = arith.constant 0 : index
      %122 = vector.load %arg5[%121, %c0_66] : memref<64x128xf32, #tpu.memory_space<vmem>>, vector<1x128xf32>
      %123 = arith.index_cast %115 : i32 to index
      %c0_67 = arith.constant 0 : index
      %c0_68 = arith.constant 0 : index
      %124 = vector.load %arg8[%123, %c0_67, %c0_68] : memref<2x8x128xf32, #tpu.memory_space<vmem>>, vector<1x1x128xf32>
      %125 = vector.shape_cast %124 : vector<1x1x128xf32> to vector<1x128xf32>
      %126 = vector.shape_cast %122 : vector<1x128xf32> to vector<1x1x128xf32>
      tpu.vector_store %arg8[%123, %c0_67, %c0_68], %126 {strides = array<i32>} : memref<2x8x128xf32, #tpu.memory_space<vmem>>, vector<1x1x128xf32>,
      %c1_i32_69 = arith.constant 1 : i32
      %127 = arith.addi %116, %c1_i32_69 : i32
      %128 = arith.addi %0, %127 : i32
      %129 = arith.index_cast %128 : i32 to index
      %130 = memref.load %arg2[%129] : memref<32xi32, #tpu.memory_space<smem>>
      %131 = arith.index_cast %130 : i32 to index
      %c0_70 = arith.constant 0 : index
      %132 = vector.load %arg5[%131, %c0_70] : memref<64x128xf32, #tpu.memory_space<vmem>>, vector<1x128xf32>
      %133 = arith.index_cast %115 : i32 to index
      %c1 = arith.constant 1 : index
      %c0_71 = arith.constant 0 : index
      %134 = vector.load %arg8[%133, %c1, %c0_71] : memref<2x8x128xf32, #tpu.memory_space<vmem>>, vector<1x1x128xf32>
      %135 = vector.shape_cast %134 : vector<1x1x128xf32> to vector<1x128xf32>
      %136 = vector.shape_cast %132 : vector<1x128xf32> to vector<1x1x128xf32>
      tpu.vector_store %arg8[%133, %c1, %c0_71], %136 {strides = array<i32>} : memref<2x8x128xf32, #tpu.memory_space<vmem>>, vector<1x1x128xf32>,
      %c2_i32_72 = arith.constant 2 : i32
      %137 = arith.addi %116, %c2_i32_72 : i32
      %138 = arith.addi %0, %137 : i32
      %139 = arith.index_cast %138 : i32 to index
      %140 = memref.load %arg2[%139] : memref<32xi32, #tpu.memory_space<smem>>
      %141 = arith.index_cast %140 : i32 to index
      %c0_73 = arith.constant 0 : index
      %142 = vector.load %arg5[%141, %c0_73] : memref<64x128xf32, #tpu.memory_space<vmem>>, vector<1x128xf32>
      %143 = arith.index_cast %115 : i32 to index
      %c2 = arith.constant 2 : index
      %c0_74 = arith.constant 0 : index
      %144 = vector.load %arg8[%143, %c2, %c0_74] : memref<2x8x128xf32, #tpu.memory_space<vmem>>, vector<1x1x128xf32>
      %145 = vector.shape_cast %144 : vector<1x1x128xf32> to vector<1x128xf32>
      %146 = vector.shape_cast %142 : vector<1x128xf32> to vector<1x1x128xf32>
      tpu.vector_store %arg8[%143, %c2, %c0_74], %146 {strides = array<i32>} : memref<2x8x128xf32, #tpu.memory_space<vmem>>, vector<1x1x128xf32>,
      %c3_i32 = arith.constant 3 : i32
      %147 = arith.addi %116, %c3_i32 : i32
      %148 = arith.addi %0, %147 : i32
      %149 = arith.index_cast %148 : i32 to index
      %150 = memref.load %arg2[%149] : memref<32xi32, #tpu.memory_space<smem>>
      %151 = arith.index_cast %150 : i32 to index
      %c0_75 = arith.constant 0 : index
      %152 = vector.load %arg5[%151, %c0_75] : memref<64x128xf32, #tpu.memory_space<vmem>>, vector<1x128xf32>
      %153 = arith.index_cast %115 : i32 to index
      %c3 = arith.constant 3 : index
      %c0_76 = arith.constant 0 : index
      %154 = vector.load %arg8[%153, %c3, %c0_76] : memref<2x8x128xf32, #tpu.memory_space<vmem>>, vector<1x1x128xf32>
      %155 = vector.shape_cast %154 : vector<1x1x128xf32> to vector<1x128xf32>
      %156 = vector.shape_cast %152 : vector<1x128xf32> to vector<1x1x128xf32>
      tpu.vector_store %arg8[%153, %c3, %c0_76], %156 {strides = array<i32>} : memref<2x8x128xf32, #tpu.memory_space<vmem>>, vector<1x1x128xf32>,
      %c4_i32 = arith.constant 4 : i32
      %157 = arith.addi %116, %c4_i32 : i32
      %158 = arith.addi %0, %157 : i32
      %159 = arith.index_cast %158 : i32 to index
      %160 = memref.load %arg2[%159] : memref<32xi32, #tpu.memory_space<smem>>
      %161 = arith.index_cast %160 : i32 to index
      %c0_77 = arith.constant 0 : index
      %162 = vector.load %arg5[%161, %c0_77] : memref<64x128xf32, #tpu.memory_space<vmem>>, vector<1x128xf32>
      %163 = arith.index_cast %115 : i32 to index
      %c4 = arith.constant 4 : index
      %c0_78 = arith.constant 0 : index
      %164 = vector.load %arg8[%163, %c4, %c0_78] : memref<2x8x128xf32, #tpu.memory_space<vmem>>, vector<1x1x128xf32>
      %165 = vector.shape_cast %164 : vector<1x1x128xf32> to vector<1x128xf32>
      %166 = vector.shape_cast %162 : vector<1x128xf32> to vector<1x1x128xf32>
      tpu.vector_store %arg8[%163, %c4, %c0_78], %166 {strides = array<i32>} : memref<2x8x128xf32, #tpu.memory_space<vmem>>, vector<1x1x128xf32>,
      %c5_i32 = arith.constant 5 : i32
      %167 = arith.addi %116, %c5_i32 : i32
      %168 = arith.addi %0, %167 : i32
      %169 = arith.index_cast %168 : i32 to index
      %170 = memref.load %arg2[%169] : memref<32xi32, #tpu.memory_space<smem>>
      %171 = arith.index_cast %170 : i32 to index
      %c0_79 = arith.constant 0 : index
      %172 = vector.load %arg5[%171, %c0_79] : memref<64x128xf32, #tpu.memory_space<vmem>>, vector<1x128xf32>
      %173 = arith.index_cast %115 : i32 to index
      %c5 = arith.constant 5 : index
      %c0_80 = arith.constant 0 : index
      %174 = vector.load %arg8[%173, %c5, %c0_80] : memref<2x8x128xf32, #tpu.memory_space<vmem>>, vector<1x1x128xf32>
      %175 = vector.shape_cast %174 : vector<1x1x128xf32> to vector<1x128xf32>
      %176 = vector.shape_cast %172 : vector<1x128xf32> to vector<1x1x128xf32>
      tpu.vector_store %arg8[%173, %c5, %c0_80], %176 {strides = array<i32>} : memref<2x8x128xf32, #tpu.memory_space<vmem>>, vector<1x1x128xf32>,
      %c6_i32 = arith.constant 6 : i32
      %177 = arith.addi %116, %c6_i32 : i32
      %178 = arith.addi %0, %177 : i32
      %179 = arith.index_cast %178 : i32 to index
      %180 = memref.load %arg2[%179] : memref<32xi32, #tpu.memory_space<smem>>
      %181 = arith.index_cast %180 : i32 to index
      %c0_81 = arith.constant 0 : index
      %182 = vector.load %arg5[%181, %c0_81] : memref<64x128xf32, #tpu.memory_space<vmem>>, vector<1x128xf32>
      %183 = arith.index_cast %115 : i32 to index
      %c6 = arith.constant 6 : index
      %c0_82 = arith.constant 0 : index
      %184 = vector.load %arg8[%183, %c6, %c0_82] : memref<2x8x128xf32, #tpu.memory_space<vmem>>, vector<1x1x128xf32>
      %185 = vector.shape_cast %184 : vector<1x1x128xf32> to vector<1x128xf32>
      %186 = vector.shape_cast %182 : vector<1x128xf32> to vector<1x1x128xf32>
      tpu.vector_store %arg8[%183, %c6, %c0_82], %186 {strides = array<i32>} : memref<2x8x128xf32, #tpu.memory_space<vmem>>, vector<1x1x128xf32>,
      %c7_i32 = arith.constant 7 : i32
      %187 = arith.addi %116, %c7_i32 : i32
      %188 = arith.addi %0, %187 : i32
      %189 = arith.index_cast %188 : i32 to index
      %190 = memref.load %arg2[%189] : memref<32xi32, #tpu.memory_space<smem>>
      %191 = arith.index_cast %190 : i32 to index
      %c0_83 = arith.constant 0 : index
      %192 = vector.load %arg5[%191, %c0_83] : memref<64x128xf32, #tpu.memory_space<vmem>>, vector<1x128xf32>
      %193 = arith.index_cast %115 : i32 to index
      %c7 = arith.constant 7 : index
      %c0_84 = arith.constant 0 : index
      %194 = vector.load %arg8[%193, %c7, %c0_84] : memref<2x8x128xf32, #tpu.memory_space<vmem>>, vector<1x1x128xf32>
      %195 = vector.shape_cast %194 : vector<1x1x128xf32> to vector<1x128xf32>
      %196 = vector.shape_cast %192 : vector<1x128xf32> to vector<1x1x128xf32>
      tpu.vector_store %arg8[%193, %c7, %c0_84], %196 {strides = array<i32>} : memref<2x8x128xf32, #tpu.memory_space<vmem>>, vector<1x1x128xf32>,
    }
    %c2_i32_4 = arith.constant 2 : i32
    %c0 = arith.constant 0 : index
    %c0_5 = arith.constant 0 : index
    %c0_6 = arith.constant 0 : index
    %3 = vector.load %arg7[%c0, %c0_5, %c0_6] : memref<2x8x128xf32, #tpu.memory_space<vmem>>, vector<2x8x128xf32>
    %c0_7 = arith.constant 0 : index
    %c0_8 = arith.constant 0 : index
    %c0_9 = arith.constant 0 : index
    %4 = vector.load %arg8[%c0_7, %c0_8, %c0_9] : memref<2x8x128xf32, #tpu.memory_space<vmem>>, vector<2x8x128xf32>
    %5 = tpu.iota {dimensions = array<i32: 0>} : vector<2x8x1xi32>
    %c8_i32 = arith.constant 8 : i32
    %6 = vector.broadcast %c8_i32 : i32 to vector<2x8x1xi32>
    %7 = arith.muli %6, %5 : vector<2x8x1xi32>
    %8 = vector.broadcast %0 : i32 to vector<2x8x1xi32>
    %9 = arith.addi %8, %7 : vector<2x8x1xi32>
    %10 = tpu.iota {dimensions = array<i32: 1>} : vector<2x8x1xi32>
    %11 = arith.addi %9, %10 : vector<2x8x1xi32>
    %c20_i32 = arith.constant 20 : i32
    %12 = vector.broadcast %c20_i32 : i32 to vector<2x8x1xi32>
    %13 = arith.cmpi slt, %11, %12 : vector<2x8x1xi32>
    %14 = arith.extui %13 : vector<2x8x1xi1> to vector<2x8x1xi32>
    %15 = arith.sitofp %14 : vector<2x8x1xi32> to vector<2x8x1xf32>
    %16 = arith.mulf %3, %4 : vector<2x8x128xf32>
    %cst = arith.constant dense<0.000000e+00> : vector<2x8xf32>
    %17 = vector.multi_reduction <add>, %16, %cst [2] : vector<2x8x128xf32> to vector<2x8xf32>
    %18 = vector.shape_cast %17 : vector<2x8xf32> to vector<2x8x1xf32>
    %cst_10 = arith.constant 0.000000e+00 : f32
    %19 = vector.broadcast %cst_10 : f32 to vector<2x8x1xf32>
    %20 = arith.subf %19, %18 : vector<2x8x1xf32>
    %cst_11 = arith.constant 0.000000e+00 : f32
    %21 = vector.broadcast %cst_11 : f32 to vector<2x8x1xf32>
    %22 = arith.maximumf %20, %21 : vector<2x8x1xf32>
    %23 = math.absf %20 : vector<2x8x1xf32>
    %cst_12 = arith.constant 0.000000e+00 : f32
    %24 = vector.broadcast %cst_12 : f32 to vector<2x8x1xf32>
    %25 = arith.subf %24, %23 : vector<2x8x1xf32>
    %26 = math.exp %25 : vector<2x8x1xf32>
    %27 = math.log1p %26 : vector<2x8x1xf32>
    %28 = arith.addf %22, %27 : vector<2x8x1xf32>
    %29 = arith.mulf %28, %15 : vector<2x8x1xf32>
    %30 = vector.shape_cast %29 : vector<2x8x1xf32> to vector<1x2x8x1xf32>
    %cst_13 = arith.constant dense<0.000000e+00> : vector<1xf32>
    %31 = vector.multi_reduction <add>, %30, %cst_13 [1, 2, 3] : vector<1x2x8x1xf32> to vector<1xf32>
    %32 = vector.shape_cast %31 : vector<1xf32> to vector<1x1x1x1xf32>
    %33 = vector.extract %32[0, 0, 0, 0] : f32 from vector<1x1x1x1xf32>
    %c0_i32_14 = arith.constant 0 : i32
    %c2_i32_15 = arith.constant 2 : i32
    %34 = arith.addi %c0_i32_14, %c2_i32_15 : i32
    %c1_i32_16 = arith.constant 1 : i32
    scf.for %arg10 = %c0_i32_14 to %34 step %c1_i32_16  : i32 {
      %c1_i32_62 = arith.constant 1 : i32
      %114 = arith.muli %arg10, %c1_i32_62 : i32
      %c0_i32_63 = arith.constant 0 : i32
      %115 = arith.addi %c0_i32_63, %114 : i32
      %c8_i32_64 = arith.constant 8 : i32
      %116 = arith.muli %115, %c8_i32_64 : i32
      %c0_i32_65 = arith.constant 0 : i32
      %117 = arith.addi %116, %c0_i32_65 : i32
      %c0_i32_66 = arith.constant 0 : i32
      %118 = arith.addi %c0_i32_66, %0 : i32
      %119 = arith.addi %118, %117 : i32
      %120 = arith.index_cast %119 : i32 to index
      %121 = memref.load %arg3[%120] : memref<128xi32, #tpu.memory_space<smem>>
      %122 = arith.index_cast %121 : i32 to index
      %c0_67 = arith.constant 0 : index
      %123 = vector.load %arg5[%122, %c0_67] : memref<64x128xf32, #tpu.memory_space<vmem>>, vector<1x128xf32>
      %124 = arith.index_cast %115 : i32 to index
      %c0_68 = arith.constant 0 : index
      %c0_69 = arith.constant 0 : index
      %125 = vector.load %arg9[%124, %c0_68, %c0_69] : memref<2x8x128xf32, #tpu.memory_space<vmem>>, vector<1x1x128xf32>
      %126 = vector.shape_cast %125 : vector<1x1x128xf32> to vector<1x128xf32>
      %127 = vector.shape_cast %123 : vector<1x128xf32> to vector<1x1x128xf32>
      tpu.vector_store %arg9[%124, %c0_68, %c0_69], %127 {strides = array<i32>} : memref<2x8x128xf32, #tpu.memory_space<vmem>>, vector<1x1x128xf32>,
      %c1_i32_70 = arith.constant 1 : i32
      %128 = arith.addi %116, %c1_i32_70 : i32
      %c0_i32_71 = arith.constant 0 : i32
      %129 = arith.addi %c0_i32_71, %0 : i32
      %130 = arith.addi %129, %128 : i32
      %131 = arith.index_cast %130 : i32 to index
      %132 = memref.load %arg3[%131] : memref<128xi32, #tpu.memory_space<smem>>
      %133 = arith.index_cast %132 : i32 to index
      %c0_72 = arith.constant 0 : index
      %134 = vector.load %arg5[%133, %c0_72] : memref<64x128xf32, #tpu.memory_space<vmem>>, vector<1x128xf32>
      %135 = arith.index_cast %115 : i32 to index
      %c1 = arith.constant 1 : index
      %c0_73 = arith.constant 0 : index
      %136 = vector.load %arg9[%135, %c1, %c0_73] : memref<2x8x128xf32, #tpu.memory_space<vmem>>, vector<1x1x128xf32>
      %137 = vector.shape_cast %136 : vector<1x1x128xf32> to vector<1x128xf32>
      %138 = vector.shape_cast %134 : vector<1x128xf32> to vector<1x1x128xf32>
      tpu.vector_store %arg9[%135, %c1, %c0_73], %138 {strides = array<i32>} : memref<2x8x128xf32, #tpu.memory_space<vmem>>, vector<1x1x128xf32>,
      %c2_i32_74 = arith.constant 2 : i32
      %139 = arith.addi %116, %c2_i32_74 : i32
      %c0_i32_75 = arith.constant 0 : i32
      %140 = arith.addi %c0_i32_75, %0 : i32
      %141 = arith.addi %140, %139 : i32
      %142 = arith.index_cast %141 : i32 to index
      %143 = memref.load %arg3[%142] : memref<128xi32, #tpu.memory_space<smem>>
      %144 = arith.index_cast %143 : i32 to index
      %c0_76 = arith.constant 0 : index
      %145 = vector.load %arg5[%144, %c0_76] : memref<64x128xf32, #tpu.memory_space<vmem>>, vector<1x128xf32>
      %146 = arith.index_cast %115 : i32 to index
      %c2 = arith.constant 2 : index
      %c0_77 = arith.constant 0 : index
      %147 = vector.load %arg9[%146, %c2, %c0_77] : memref<2x8x128xf32, #tpu.memory_space<vmem>>, vector<1x1x128xf32>
      %148 = vector.shape_cast %147 : vector<1x1x128xf32> to vector<1x128xf32>
      %149 = vector.shape_cast %145 : vector<1x128xf32> to vector<1x1x128xf32>
      tpu.vector_store %arg9[%146, %c2, %c0_77], %149 {strides = array<i32>} : memref<2x8x128xf32, #tpu.memory_space<vmem>>, vector<1x1x128xf32>,
      %c3_i32 = arith.constant 3 : i32
      %150 = arith.addi %116, %c3_i32 : i32
      %c0_i32_78 = arith.constant 0 : i32
      %151 = arith.addi %c0_i32_78, %0 : i32
      %152 = arith.addi %151, %150 : i32
      %153 = arith.index_cast %152 : i32 to index
      %154 = memref.load %arg3[%153] : memref<128xi32, #tpu.memory_space<smem>>
      %155 = arith.index_cast %154 : i32 to index
      %c0_79 = arith.constant 0 : index
      %156 = vector.load %arg5[%155, %c0_79] : memref<64x128xf32, #tpu.memory_space<vmem>>, vector<1x128xf32>
      %157 = arith.index_cast %115 : i32 to index
      %c3 = arith.constant 3 : index
      %c0_80 = arith.constant 0 : index
      %158 = vector.load %arg9[%157, %c3, %c0_80] : memref<2x8x128xf32, #tpu.memory_space<vmem>>, vector<1x1x128xf32>
      %159 = vector.shape_cast %158 : vector<1x1x128xf32> to vector<1x128xf32>
      %160 = vector.shape_cast %156 : vector<1x128xf32> to vector<1x1x128xf32>
      tpu.vector_store %arg9[%157, %c3, %c0_80], %160 {strides = array<i32>} : memref<2x8x128xf32, #tpu.memory_space<vmem>>, vector<1x1x128xf32>,
      %c4_i32 = arith.constant 4 : i32
      %161 = arith.addi %116, %c4_i32 : i32
      %c0_i32_81 = arith.constant 0 : i32
      %162 = arith.addi %c0_i32_81, %0 : i32
      %163 = arith.addi %162, %161 : i32
      %164 = arith.index_cast %163 : i32 to index
      %165 = memref.load %arg3[%164] : memref<128xi32, #tpu.memory_space<smem>>
      %166 = arith.index_cast %165 : i32 to index
      %c0_82 = arith.constant 0 : index
      %167 = vector.load %arg5[%166, %c0_82] : memref<64x128xf32, #tpu.memory_space<vmem>>, vector<1x128xf32>
      %168 = arith.index_cast %115 : i32 to index
      %c4 = arith.constant 4 : index
      %c0_83 = arith.constant 0 : index
      %169 = vector.load %arg9[%168, %c4, %c0_83] : memref<2x8x128xf32, #tpu.memory_space<vmem>>, vector<1x1x128xf32>
      %170 = vector.shape_cast %169 : vector<1x1x128xf32> to vector<1x128xf32>
      %171 = vector.shape_cast %167 : vector<1x128xf32> to vector<1x1x128xf32>
      tpu.vector_store %arg9[%168, %c4, %c0_83], %171 {strides = array<i32>} : memref<2x8x128xf32, #tpu.memory_space<vmem>>, vector<1x1x128xf32>,
      %c5_i32 = arith.constant 5 : i32
      %172 = arith.addi %116, %c5_i32 : i32
      %c0_i32_84 = arith.constant 0 : i32
      %173 = arith.addi %c0_i32_84, %0 : i32
      %174 = arith.addi %173, %172 : i32
      %175 = arith.index_cast %174 : i32 to index
      %176 = memref.load %arg3[%175] : memref<128xi32, #tpu.memory_space<smem>>
      %177 = arith.index_cast %176 : i32 to index
      %c0_85 = arith.constant 0 : index
      %178 = vector.load %arg5[%177, %c0_85] : memref<64x128xf32, #tpu.memory_space<vmem>>, vector<1x128xf32>
      %179 = arith.index_cast %115 : i32 to index
      %c5 = arith.constant 5 : index
      %c0_86 = arith.constant 0 : index
      %180 = vector.load %arg9[%179, %c5, %c0_86] : memref<2x8x128xf32, #tpu.memory_space<vmem>>, vector<1x1x128xf32>
      %181 = vector.shape_cast %180 : vector<1x1x128xf32> to vector<1x128xf32>
      %182 = vector.shape_cast %178 : vector<1x128xf32> to vector<1x1x128xf32>
      tpu.vector_store %arg9[%179, %c5, %c0_86], %182 {strides = array<i32>} : memref<2x8x128xf32, #tpu.memory_space<vmem>>, vector<1x1x128xf32>,
      %c6_i32 = arith.constant 6 : i32
      %183 = arith.addi %116, %c6_i32 : i32
      %c0_i32_87 = arith.constant 0 : i32
      %184 = arith.addi %c0_i32_87, %0 : i32
      %185 = arith.addi %184, %183 : i32
      %186 = arith.index_cast %185 : i32 to index
      %187 = memref.load %arg3[%186] : memref<128xi32, #tpu.memory_space<smem>>
      %188 = arith.index_cast %187 : i32 to index
      %c0_88 = arith.constant 0 : index
      %189 = vector.load %arg5[%188, %c0_88] : memref<64x128xf32, #tpu.memory_space<vmem>>, vector<1x128xf32>
      %190 = arith.index_cast %115 : i32 to index
      %c6 = arith.constant 6 : index
      %c0_89 = arith.constant 0 : index
      %191 = vector.load %arg9[%190, %c6, %c0_89] : memref<2x8x128xf32, #tpu.memory_space<vmem>>, vector<1x1x128xf32>
      %192 = vector.shape_cast %191 : vector<1x1x128xf32> to vector<1x128xf32>
      %193 = vector.shape_cast %189 : vector<1x128xf32> to vector<1x1x128xf32>
      tpu.vector_store %arg9[%190, %c6, %c0_89], %193 {strides = array<i32>} : memref<2x8x128xf32, #tpu.memory_space<vmem>>, vector<1x1x128xf32>,
      %c7_i32 = arith.constant 7 : i32
      %194 = arith.addi %116, %c7_i32 : i32
      %c0_i32_90 = arith.constant 0 : i32
      %195 = arith.addi %c0_i32_90, %0 : i32
      %196 = arith.addi %195, %194 : i32
      %197 = arith.index_cast %196 : i32 to index
      %198 = memref.load %arg3[%197] : memref<128xi32, #tpu.memory_space<smem>>
      %199 = arith.index_cast %198 : i32 to index
      %c0_91 = arith.constant 0 : index
      %200 = vector.load %arg5[%199, %c0_91] : memref<64x128xf32, #tpu.memory_space<vmem>>, vector<1x128xf32>
      %201 = arith.index_cast %115 : i32 to index
      %c7 = arith.constant 7 : index
      %c0_92 = arith.constant 0 : index
      %202 = vector.load %arg9[%201, %c7, %c0_92] : memref<2x8x128xf32, #tpu.memory_space<vmem>>, vector<1x1x128xf32>
      %203 = vector.shape_cast %202 : vector<1x1x128xf32> to vector<1x128xf32>
      %204 = vector.shape_cast %200 : vector<1x128xf32> to vector<1x1x128xf32>
      tpu.vector_store %arg9[%201, %c7, %c0_92], %204 {strides = array<i32>} : memref<2x8x128xf32, #tpu.memory_space<vmem>>, vector<1x1x128xf32>,
    }
    %c2_i32_17 = arith.constant 2 : i32
    %c0_18 = arith.constant 0 : index
    %c0_19 = arith.constant 0 : index
    %c0_20 = arith.constant 0 : index
    %35 = vector.load %arg9[%c0_18, %c0_19, %c0_20] : memref<2x8x128xf32, #tpu.memory_space<vmem>>, vector<2x8x128xf32>
    %36 = arith.mulf %3, %35 : vector<2x8x128xf32>
    %cst_21 = arith.constant dense<0.000000e+00> : vector<2x8xf32>
    %37 = vector.multi_reduction <add>, %36, %cst_21 [2] : vector<2x8x128xf32> to vector<2x8xf32>
    %38 = vector.shape_cast %37 : vector<2x8xf32> to vector<2x8x1xf32>
    %cst_22 = arith.constant 0.000000e+00 : f32
    %39 = vector.broadcast %cst_22 : f32 to vector<2x8x1xf32>
    %40 = arith.maximumf %38, %39 : vector<2x8x1xf32>
    %41 = math.absf %38 : vector<2x8x1xf32>
    %cst_23 = arith.constant 0.000000e+00 : f32
    %42 = vector.broadcast %cst_23 : f32 to vector<2x8x1xf32>
    %43 = arith.subf %42, %41 : vector<2x8x1xf32>
    %44 = math.exp %43 : vector<2x8x1xf32>
    %45 = math.log1p %44 : vector<2x8x1xf32>
    %46 = arith.addf %40, %45 : vector<2x8x1xf32>
    %47 = arith.mulf %46, %15 : vector<2x8x1xf32>
    %48 = vector.shape_cast %47 : vector<2x8x1xf32> to vector<1x2x8x1xf32>
    %cst_24 = arith.constant dense<0.000000e+00> : vector<1xf32>
    %49 = vector.multi_reduction <add>, %48, %cst_24 [1, 2, 3] : vector<1x2x8x1xf32> to vector<1xf32>
    %50 = vector.shape_cast %49 : vector<1xf32> to vector<1x1x1x1xf32>
    %51 = vector.extract %50[0, 0, 0, 0] : f32 from vector<1x1x1x1xf32>
    %52 = arith.addf %33, %51 : f32
    %c0_i32_25 = arith.constant 0 : i32
    %c2_i32_26 = arith.constant 2 : i32
    %53 = arith.addi %c0_i32_25, %c2_i32_26 : i32
    %c1_i32_27 = arith.constant 1 : i32
    scf.for %arg10 = %c0_i32_25 to %53 step %c1_i32_27  : i32 {
      %c1_i32_62 = arith.constant 1 : i32
      %114 = arith.muli %arg10, %c1_i32_62 : i32
      %c0_i32_63 = arith.constant 0 : i32
      %115 = arith.addi %c0_i32_63, %114 : i32
      %c8_i32_64 = arith.constant 8 : i32
      %116 = arith.muli %115, %c8_i32_64 : i32
      %c0_i32_65 = arith.constant 0 : i32
      %117 = arith.addi %116, %c0_i32_65 : i32
      %c32_i32 = arith.constant 32 : i32
      %118 = arith.addi %c32_i32, %0 : i32
      %119 = arith.addi %118, %117 : i32
      %120 = arith.index_cast %119 : i32 to index
      %121 = memref.load %arg3[%120] : memref<128xi32, #tpu.memory_space<smem>>
      %122 = arith.index_cast %121 : i32 to index
      %c0_66 = arith.constant 0 : index
      %123 = vector.load %arg5[%122, %c0_66] : memref<64x128xf32, #tpu.memory_space<vmem>>, vector<1x128xf32>
      %124 = arith.index_cast %115 : i32 to index
      %c0_67 = arith.constant 0 : index
      %c0_68 = arith.constant 0 : index
      %125 = vector.load %arg9[%124, %c0_67, %c0_68] : memref<2x8x128xf32, #tpu.memory_space<vmem>>, vector<1x1x128xf32>
      %126 = vector.shape_cast %125 : vector<1x1x128xf32> to vector<1x128xf32>
      %127 = vector.shape_cast %123 : vector<1x128xf32> to vector<1x1x128xf32>
      tpu.vector_store %arg9[%124, %c0_67, %c0_68], %127 {strides = array<i32>} : memref<2x8x128xf32, #tpu.memory_space<vmem>>, vector<1x1x128xf32>,
      %c1_i32_69 = arith.constant 1 : i32
      %128 = arith.addi %116, %c1_i32_69 : i32
      %c32_i32_70 = arith.constant 32 : i32
      %129 = arith.addi %c32_i32_70, %0 : i32
      %130 = arith.addi %129, %128 : i32
      %131 = arith.index_cast %130 : i32 to index
      %132 = memref.load %arg3[%131] : memref<128xi32, #tpu.memory_space<smem>>
      %133 = arith.index_cast %132 : i32 to index
      %c0_71 = arith.constant 0 : index
      %134 = vector.load %arg5[%133, %c0_71] : memref<64x128xf32, #tpu.memory_space<vmem>>, vector<1x128xf32>
      %135 = arith.index_cast %115 : i32 to index
      %c1 = arith.constant 1 : index
      %c0_72 = arith.constant 0 : index
      %136 = vector.load %arg9[%135, %c1, %c0_72] : memref<2x8x128xf32, #tpu.memory_space<vmem>>, vector<1x1x128xf32>
      %137 = vector.shape_cast %136 : vector<1x1x128xf32> to vector<1x128xf32>
      %138 = vector.shape_cast %134 : vector<1x128xf32> to vector<1x1x128xf32>
      tpu.vector_store %arg9[%135, %c1, %c0_72], %138 {strides = array<i32>} : memref<2x8x128xf32, #tpu.memory_space<vmem>>, vector<1x1x128xf32>,
      %c2_i32_73 = arith.constant 2 : i32
      %139 = arith.addi %116, %c2_i32_73 : i32
      %c32_i32_74 = arith.constant 32 : i32
      %140 = arith.addi %c32_i32_74, %0 : i32
      %141 = arith.addi %140, %139 : i32
      %142 = arith.index_cast %141 : i32 to index
      %143 = memref.load %arg3[%142] : memref<128xi32, #tpu.memory_space<smem>>
      %144 = arith.index_cast %143 : i32 to index
      %c0_75 = arith.constant 0 : index
      %145 = vector.load %arg5[%144, %c0_75] : memref<64x128xf32, #tpu.memory_space<vmem>>, vector<1x128xf32>
      %146 = arith.index_cast %115 : i32 to index
      %c2 = arith.constant 2 : index
      %c0_76 = arith.constant 0 : index
      %147 = vector.load %arg9[%146, %c2, %c0_76] : memref<2x8x128xf32, #tpu.memory_space<vmem>>, vector<1x1x128xf32>
      %148 = vector.shape_cast %147 : vector<1x1x128xf32> to vector<1x128xf32>
      %149 = vector.shape_cast %145 : vector<1x128xf32> to vector<1x1x128xf32>
      tpu.vector_store %arg9[%146, %c2, %c0_76], %149 {strides = array<i32>} : memref<2x8x128xf32, #tpu.memory_space<vmem>>, vector<1x1x128xf32>,
      %c3_i32 = arith.constant 3 : i32
      %150 = arith.addi %116, %c3_i32 : i32
      %c32_i32_77 = arith.constant 32 : i32
      %151 = arith.addi %c32_i32_77, %0 : i32
      %152 = arith.addi %151, %150 : i32
      %153 = arith.index_cast %152 : i32 to index
      %154 = memref.load %arg3[%153] : memref<128xi32, #tpu.memory_space<smem>>
      %155 = arith.index_cast %154 : i32 to index
      %c0_78 = arith.constant 0 : index
      %156 = vector.load %arg5[%155, %c0_78] : memref<64x128xf32, #tpu.memory_space<vmem>>, vector<1x128xf32>
      %157 = arith.index_cast %115 : i32 to index
      %c3 = arith.constant 3 : index
      %c0_79 = arith.constant 0 : index
      %158 = vector.load %arg9[%157, %c3, %c0_79] : memref<2x8x128xf32, #tpu.memory_space<vmem>>, vector<1x1x128xf32>
      %159 = vector.shape_cast %158 : vector<1x1x128xf32> to vector<1x128xf32>
      %160 = vector.shape_cast %156 : vector<1x128xf32> to vector<1x1x128xf32>
      tpu.vector_store %arg9[%157, %c3, %c0_79], %160 {strides = array<i32>} : memref<2x8x128xf32, #tpu.memory_space<vmem>>, vector<1x1x128xf32>,
      %c4_i32 = arith.constant 4 : i32
      %161 = arith.addi %116, %c4_i32 : i32
      %c32_i32_80 = arith.constant 32 : i32
      %162 = arith.addi %c32_i32_80, %0 : i32
      %163 = arith.addi %162, %161 : i32
      %164 = arith.index_cast %163 : i32 to index
      %165 = memref.load %arg3[%164] : memref<128xi32, #tpu.memory_space<smem>>
      %166 = arith.index_cast %165 : i32 to index
      %c0_81 = arith.constant 0 : index
      %167 = vector.load %arg5[%166, %c0_81] : memref<64x128xf32, #tpu.memory_space<vmem>>, vector<1x128xf32>
      %168 = arith.index_cast %115 : i32 to index
      %c4 = arith.constant 4 : index
      %c0_82 = arith.constant 0 : index
      %169 = vector.load %arg9[%168, %c4, %c0_82] : memref<2x8x128xf32, #tpu.memory_space<vmem>>, vector<1x1x128xf32>
      %170 = vector.shape_cast %169 : vector<1x1x128xf32> to vector<1x128xf32>
      %171 = vector.shape_cast %167 : vector<1x128xf32> to vector<1x1x128xf32>
      tpu.vector_store %arg9[%168, %c4, %c0_82], %171 {strides = array<i32>} : memref<2x8x128xf32, #tpu.memory_space<vmem>>, vector<1x1x128xf32>,
      %c5_i32 = arith.constant 5 : i32
      %172 = arith.addi %116, %c5_i32 : i32
      %c32_i32_83 = arith.constant 32 : i32
      %173 = arith.addi %c32_i32_83, %0 : i32
      %174 = arith.addi %173, %172 : i32
      %175 = arith.index_cast %174 : i32 to index
      %176 = memref.load %arg3[%175] : memref<128xi32, #tpu.memory_space<smem>>
      %177 = arith.index_cast %176 : i32 to index
      %c0_84 = arith.constant 0 : index
      %178 = vector.load %arg5[%177, %c0_84] : memref<64x128xf32, #tpu.memory_space<vmem>>, vector<1x128xf32>
      %179 = arith.index_cast %115 : i32 to index
      %c5 = arith.constant 5 : index
      %c0_85 = arith.constant 0 : index
      %180 = vector.load %arg9[%179, %c5, %c0_85] : memref<2x8x128xf32, #tpu.memory_space<vmem>>, vector<1x1x128xf32>
      %181 = vector.shape_cast %180 : vector<1x1x128xf32> to vector<1x128xf32>
      %182 = vector.shape_cast %178 : vector<1x128xf32> to vector<1x1x128xf32>
      tpu.vector_store %arg9[%179, %c5, %c0_85], %182 {strides = array<i32>} : memref<2x8x128xf32, #tpu.memory_space<vmem>>, vector<1x1x128xf32>,
      %c6_i32 = arith.constant 6 : i32
      %183 = arith.addi %116, %c6_i32 : i32
      %c32_i32_86 = arith.constant 32 : i32
      %184 = arith.addi %c32_i32_86, %0 : i32
      %185 = arith.addi %184, %183 : i32
      %186 = arith.index_cast %185 : i32 to index
      %187 = memref.load %arg3[%186] : memref<128xi32, #tpu.memory_space<smem>>
      %188 = arith.index_cast %187 : i32 to index
      %c0_87 = arith.constant 0 : index
      %189 = vector.load %arg5[%188, %c0_87] : memref<64x128xf32, #tpu.memory_space<vmem>>, vector<1x128xf32>
      %190 = arith.index_cast %115 : i32 to index
      %c6 = arith.constant 6 : index
      %c0_88 = arith.constant 0 : index
      %191 = vector.load %arg9[%190, %c6, %c0_88] : memref<2x8x128xf32, #tpu.memory_space<vmem>>, vector<1x1x128xf32>
      %192 = vector.shape_cast %191 : vector<1x1x128xf32> to vector<1x128xf32>
      %193 = vector.shape_cast %189 : vector<1x128xf32> to vector<1x1x128xf32>
      tpu.vector_store %arg9[%190, %c6, %c0_88], %193 {strides = array<i32>} : memref<2x8x128xf32, #tpu.memory_space<vmem>>, vector<1x1x128xf32>,
      %c7_i32 = arith.constant 7 : i32
      %194 = arith.addi %116, %c7_i32 : i32
      %c32_i32_89 = arith.constant 32 : i32
      %195 = arith.addi %c32_i32_89, %0 : i32
      %196 = arith.addi %195, %194 : i32
      %197 = arith.index_cast %196 : i32 to index
      %198 = memref.load %arg3[%197] : memref<128xi32, #tpu.memory_space<smem>>
      %199 = arith.index_cast %198 : i32 to index
      %c0_90 = arith.constant 0 : index
      %200 = vector.load %arg5[%199, %c0_90] : memref<64x128xf32, #tpu.memory_space<vmem>>, vector<1x128xf32>
      %201 = arith.index_cast %115 : i32 to index
      %c7 = arith.constant 7 : index
      %c0_91 = arith.constant 0 : index
      %202 = vector.load %arg9[%201, %c7, %c0_91] : memref<2x8x128xf32, #tpu.memory_space<vmem>>, vector<1x1x128xf32>
      %203 = vector.shape_cast %202 : vector<1x1x128xf32> to vector<1x128xf32>
      %204 = vector.shape_cast %200 : vector<1x128xf32> to vector<1x1x128xf32>
      tpu.vector_store %arg9[%201, %c7, %c0_91], %204 {strides = array<i32>} : memref<2x8x128xf32, #tpu.memory_space<vmem>>, vector<1x1x128xf32>,
    }
    %c2_i32_28 = arith.constant 2 : i32
    %c0_29 = arith.constant 0 : index
    %c0_30 = arith.constant 0 : index
    %c0_31 = arith.constant 0 : index
    %54 = vector.load %arg9[%c0_29, %c0_30, %c0_31] : memref<2x8x128xf32, #tpu.memory_space<vmem>>, vector<2x8x128xf32>
    %55 = arith.mulf %3, %54 : vector<2x8x128xf32>
    %cst_32 = arith.constant dense<0.000000e+00> : vector<2x8xf32>
    %56 = vector.multi_reduction <add>, %55, %cst_32 [2] : vector<2x8x128xf32> to vector<2x8xf32>
    %57 = vector.shape_cast %56 : vector<2x8xf32> to vector<2x8x1xf32>
    %cst_33 = arith.constant 0.000000e+00 : f32
    %58 = vector.broadcast %cst_33 : f32 to vector<2x8x1xf32>
    %59 = arith.maximumf %57, %58 : vector<2x8x1xf32>
    %60 = math.absf %57 : vector<2x8x1xf32>
    %cst_34 = arith.constant 0.000000e+00 : f32
    %61 = vector.broadcast %cst_34 : f32 to vector<2x8x1xf32>
    %62 = arith.subf %61, %60 : vector<2x8x1xf32>
    %63 = math.exp %62 : vector<2x8x1xf32>
    %64 = math.log1p %63 : vector<2x8x1xf32>
    %65 = arith.addf %59, %64 : vector<2x8x1xf32>
    %66 = arith.mulf %65, %15 : vector<2x8x1xf32>
    %67 = vector.shape_cast %66 : vector<2x8x1xf32> to vector<1x2x8x1xf32>
    %cst_35 = arith.constant dense<0.000000e+00> : vector<1xf32>
    %68 = vector.multi_reduction <add>, %67, %cst_35 [1, 2, 3] : vector<1x2x8x1xf32> to vector<1xf32>
    %69 = vector.shape_cast %68 : vector<1xf32> to vector<1x1x1x1xf32>
    %70 = vector.extract %69[0, 0, 0, 0] : f32 from vector<1x1x1x1xf32>
    %71 = arith.addf %52, %70 : f32
    %c0_i32_36 = arith.constant 0 : i32
    %c2_i32_37 = arith.constant 2 : i32
    %72 = arith.addi %c0_i32_36, %c2_i32_37 : i32
    %c1_i32_38 = arith.constant 1 : i32
    scf.for %arg10 = %c0_i32_36 to %72 step %c1_i32_38  : i32 {
      %c1_i32_62 = arith.constant 1 : i32
      %114 = arith.muli %arg10, %c1_i32_62 : i32
      %c0_i32_63 = arith.constant 0 : i32
      %115 = arith.addi %c0_i32_63, %114 : i32
      %c8_i32_64 = arith.constant 8 : i32
      %116 = arith.muli %115, %c8_i32_64 : i32
      %c0_i32_65 = arith.constant 0 : i32
      %117 = arith.addi %116, %c0_i32_65 : i32
      %c64_i32 = arith.constant 64 : i32
      %118 = arith.addi %c64_i32, %0 : i32
      %119 = arith.addi %118, %117 : i32
      %120 = arith.index_cast %119 : i32 to index
      %121 = memref.load %arg3[%120] : memref<128xi32, #tpu.memory_space<smem>>
      %122 = arith.index_cast %121 : i32 to index
      %c0_66 = arith.constant 0 : index
      %123 = vector.load %arg5[%122, %c0_66] : memref<64x128xf32, #tpu.memory_space<vmem>>, vector<1x128xf32>
      %124 = arith.index_cast %115 : i32 to index
      %c0_67 = arith.constant 0 : index
      %c0_68 = arith.constant 0 : index
      %125 = vector.load %arg9[%124, %c0_67, %c0_68] : memref<2x8x128xf32, #tpu.memory_space<vmem>>, vector<1x1x128xf32>
      %126 = vector.shape_cast %125 : vector<1x1x128xf32> to vector<1x128xf32>
      %127 = vector.shape_cast %123 : vector<1x128xf32> to vector<1x1x128xf32>
      tpu.vector_store %arg9[%124, %c0_67, %c0_68], %127 {strides = array<i32>} : memref<2x8x128xf32, #tpu.memory_space<vmem>>, vector<1x1x128xf32>,
      %c1_i32_69 = arith.constant 1 : i32
      %128 = arith.addi %116, %c1_i32_69 : i32
      %c64_i32_70 = arith.constant 64 : i32
      %129 = arith.addi %c64_i32_70, %0 : i32
      %130 = arith.addi %129, %128 : i32
      %131 = arith.index_cast %130 : i32 to index
      %132 = memref.load %arg3[%131] : memref<128xi32, #tpu.memory_space<smem>>
      %133 = arith.index_cast %132 : i32 to index
      %c0_71 = arith.constant 0 : index
      %134 = vector.load %arg5[%133, %c0_71] : memref<64x128xf32, #tpu.memory_space<vmem>>, vector<1x128xf32>
      %135 = arith.index_cast %115 : i32 to index
      %c1 = arith.constant 1 : index
      %c0_72 = arith.constant 0 : index
      %136 = vector.load %arg9[%135, %c1, %c0_72] : memref<2x8x128xf32, #tpu.memory_space<vmem>>, vector<1x1x128xf32>
      %137 = vector.shape_cast %136 : vector<1x1x128xf32> to vector<1x128xf32>
      %138 = vector.shape_cast %134 : vector<1x128xf32> to vector<1x1x128xf32>
      tpu.vector_store %arg9[%135, %c1, %c0_72], %138 {strides = array<i32>} : memref<2x8x128xf32, #tpu.memory_space<vmem>>, vector<1x1x128xf32>,
      %c2_i32_73 = arith.constant 2 : i32
      %139 = arith.addi %116, %c2_i32_73 : i32
      %c64_i32_74 = arith.constant 64 : i32
      %140 = arith.addi %c64_i32_74, %0 : i32
      %141 = arith.addi %140, %139 : i32
      %142 = arith.index_cast %141 : i32 to index
      %143 = memref.load %arg3[%142] : memref<128xi32, #tpu.memory_space<smem>>
      %144 = arith.index_cast %143 : i32 to index
      %c0_75 = arith.constant 0 : index
      %145 = vector.load %arg5[%144, %c0_75] : memref<64x128xf32, #tpu.memory_space<vmem>>, vector<1x128xf32>
      %146 = arith.index_cast %115 : i32 to index
      %c2 = arith.constant 2 : index
      %c0_76 = arith.constant 0 : index
      %147 = vector.load %arg9[%146, %c2, %c0_76] : memref<2x8x128xf32, #tpu.memory_space<vmem>>, vector<1x1x128xf32>
      %148 = vector.shape_cast %147 : vector<1x1x128xf32> to vector<1x128xf32>
      %149 = vector.shape_cast %145 : vector<1x128xf32> to vector<1x1x128xf32>
      tpu.vector_store %arg9[%146, %c2, %c0_76], %149 {strides = array<i32>} : memref<2x8x128xf32, #tpu.memory_space<vmem>>, vector<1x1x128xf32>,
      %c3_i32 = arith.constant 3 : i32
      %150 = arith.addi %116, %c3_i32 : i32
      %c64_i32_77 = arith.constant 64 : i32
      %151 = arith.addi %c64_i32_77, %0 : i32
      %152 = arith.addi %151, %150 : i32
      %153 = arith.index_cast %152 : i32 to index
      %154 = memref.load %arg3[%153] : memref<128xi32, #tpu.memory_space<smem>>
      %155 = arith.index_cast %154 : i32 to index
      %c0_78 = arith.constant 0 : index
      %156 = vector.load %arg5[%155, %c0_78] : memref<64x128xf32, #tpu.memory_space<vmem>>, vector<1x128xf32>
      %157 = arith.index_cast %115 : i32 to index
      %c3 = arith.constant 3 : index
      %c0_79 = arith.constant 0 : index
      %158 = vector.load %arg9[%157, %c3, %c0_79] : memref<2x8x128xf32, #tpu.memory_space<vmem>>, vector<1x1x128xf32>
      %159 = vector.shape_cast %158 : vector<1x1x128xf32> to vector<1x128xf32>
      %160 = vector.shape_cast %156 : vector<1x128xf32> to vector<1x1x128xf32>
      tpu.vector_store %arg9[%157, %c3, %c0_79], %160 {strides = array<i32>} : memref<2x8x128xf32, #tpu.memory_space<vmem>>, vector<1x1x128xf32>,
      %c4_i32 = arith.constant 4 : i32
      %161 = arith.addi %116, %c4_i32 : i32
      %c64_i32_80 = arith.constant 64 : i32
      %162 = arith.addi %c64_i32_80, %0 : i32
      %163 = arith.addi %162, %161 : i32
      %164 = arith.index_cast %163 : i32 to index
      %165 = memref.load %arg3[%164] : memref<128xi32, #tpu.memory_space<smem>>
      %166 = arith.index_cast %165 : i32 to index
      %c0_81 = arith.constant 0 : index
      %167 = vector.load %arg5[%166, %c0_81] : memref<64x128xf32, #tpu.memory_space<vmem>>, vector<1x128xf32>
      %168 = arith.index_cast %115 : i32 to index
      %c4 = arith.constant 4 : index
      %c0_82 = arith.constant 0 : index
      %169 = vector.load %arg9[%168, %c4, %c0_82] : memref<2x8x128xf32, #tpu.memory_space<vmem>>, vector<1x1x128xf32>
      %170 = vector.shape_cast %169 : vector<1x1x128xf32> to vector<1x128xf32>
      %171 = vector.shape_cast %167 : vector<1x128xf32> to vector<1x1x128xf32>
      tpu.vector_store %arg9[%168, %c4, %c0_82], %171 {strides = array<i32>} : memref<2x8x128xf32, #tpu.memory_space<vmem>>, vector<1x1x128xf32>,
      %c5_i32 = arith.constant 5 : i32
      %172 = arith.addi %116, %c5_i32 : i32
      %c64_i32_83 = arith.constant 64 : i32
      %173 = arith.addi %c64_i32_83, %0 : i32
      %174 = arith.addi %173, %172 : i32
      %175 = arith.index_cast %174 : i32 to index
      %176 = memref.load %arg3[%175] : memref<128xi32, #tpu.memory_space<smem>>
      %177 = arith.index_cast %176 : i32 to index
      %c0_84 = arith.constant 0 : index
      %178 = vector.load %arg5[%177, %c0_84] : memref<64x128xf32, #tpu.memory_space<vmem>>, vector<1x128xf32>
      %179 = arith.index_cast %115 : i32 to index
      %c5 = arith.constant 5 : index
      %c0_85 = arith.constant 0 : index
      %180 = vector.load %arg9[%179, %c5, %c0_85] : memref<2x8x128xf32, #tpu.memory_space<vmem>>, vector<1x1x128xf32>
      %181 = vector.shape_cast %180 : vector<1x1x128xf32> to vector<1x128xf32>
      %182 = vector.shape_cast %178 : vector<1x128xf32> to vector<1x1x128xf32>
      tpu.vector_store %arg9[%179, %c5, %c0_85], %182 {strides = array<i32>} : memref<2x8x128xf32, #tpu.memory_space<vmem>>, vector<1x1x128xf32>,
      %c6_i32 = arith.constant 6 : i32
      %183 = arith.addi %116, %c6_i32 : i32
      %c64_i32_86 = arith.constant 64 : i32
      %184 = arith.addi %c64_i32_86, %0 : i32
      %185 = arith.addi %184, %183 : i32
      %186 = arith.index_cast %185 : i32 to index
      %187 = memref.load %arg3[%186] : memref<128xi32, #tpu.memory_space<smem>>
      %188 = arith.index_cast %187 : i32 to index
      %c0_87 = arith.constant 0 : index
      %189 = vector.load %arg5[%188, %c0_87] : memref<64x128xf32, #tpu.memory_space<vmem>>, vector<1x128xf32>
      %190 = arith.index_cast %115 : i32 to index
      %c6 = arith.constant 6 : index
      %c0_88 = arith.constant 0 : index
      %191 = vector.load %arg9[%190, %c6, %c0_88] : memref<2x8x128xf32, #tpu.memory_space<vmem>>, vector<1x1x128xf32>
      %192 = vector.shape_cast %191 : vector<1x1x128xf32> to vector<1x128xf32>
      %193 = vector.shape_cast %189 : vector<1x128xf32> to vector<1x1x128xf32>
      tpu.vector_store %arg9[%190, %c6, %c0_88], %193 {strides = array<i32>} : memref<2x8x128xf32, #tpu.memory_space<vmem>>, vector<1x1x128xf32>,
      %c7_i32 = arith.constant 7 : i32
      %194 = arith.addi %116, %c7_i32 : i32
      %c64_i32_89 = arith.constant 64 : i32
      %195 = arith.addi %c64_i32_89, %0 : i32
      %196 = arith.addi %195, %194 : i32
      %197 = arith.index_cast %196 : i32 to index
      %198 = memref.load %arg3[%197] : memref<128xi32, #tpu.memory_space<smem>>
      %199 = arith.index_cast %198 : i32 to index
      %c0_90 = arith.constant 0 : index
      %200 = vector.load %arg5[%199, %c0_90] : memref<64x128xf32, #tpu.memory_space<vmem>>, vector<1x128xf32>
      %201 = arith.index_cast %115 : i32 to index
      %c7 = arith.constant 7 : index
      %c0_91 = arith.constant 0 : index
      %202 = vector.load %arg9[%201, %c7, %c0_91] : memref<2x8x128xf32, #tpu.memory_space<vmem>>, vector<1x1x128xf32>
      %203 = vector.shape_cast %202 : vector<1x1x128xf32> to vector<1x128xf32>
      %204 = vector.shape_cast %200 : vector<1x128xf32> to vector<1x1x128xf32>
      tpu.vector_store %arg9[%201, %c7, %c0_91], %204 {strides = array<i32>} : memref<2x8x128xf32, #tpu.memory_space<vmem>>, vector<1x1x128xf32>,
    }
    %c2_i32_39 = arith.constant 2 : i32
    %c0_40 = arith.constant 0 : index
    %c0_41 = arith.constant 0 : index
    %c0_42 = arith.constant 0 : index
    %73 = vector.load %arg9[%c0_40, %c0_41, %c0_42] : memref<2x8x128xf32, #tpu.memory_space<vmem>>, vector<2x8x128xf32>
    %74 = arith.mulf %3, %73 : vector<2x8x128xf32>
    %cst_43 = arith.constant dense<0.000000e+00> : vector<2x8xf32>
    %75 = vector.multi_reduction <add>, %74, %cst_43 [2] : vector<2x8x128xf32> to vector<2x8xf32>
    %76 = vector.shape_cast %75 : vector<2x8xf32> to vector<2x8x1xf32>
    %cst_44 = arith.constant 0.000000e+00 : f32
    %77 = vector.broadcast %cst_44 : f32 to vector<2x8x1xf32>
    %78 = arith.maximumf %76, %77 : vector<2x8x1xf32>
    %79 = math.absf %76 : vector<2x8x1xf32>
    %cst_45 = arith.constant 0.000000e+00 : f32
    %80 = vector.broadcast %cst_45 : f32 to vector<2x8x1xf32>
    %81 = arith.subf %80, %79 : vector<2x8x1xf32>
    %82 = math.exp %81 : vector<2x8x1xf32>
    %83 = math.log1p %82 : vector<2x8x1xf32>
    %84 = arith.addf %78, %83 : vector<2x8x1xf32>
    %85 = arith.mulf %84, %15 : vector<2x8x1xf32>
    %86 = vector.shape_cast %85 : vector<2x8x1xf32> to vector<1x2x8x1xf32>
    %cst_46 = arith.constant dense<0.000000e+00> : vector<1xf32>
    %87 = vector.multi_reduction <add>, %86, %cst_46 [1, 2, 3] : vector<1x2x8x1xf32> to vector<1xf32>
    %88 = vector.shape_cast %87 : vector<1xf32> to vector<1x1x1x1xf32>
    %89 = vector.extract %88[0, 0, 0, 0] : f32 from vector<1x1x1x1xf32>
    %90 = arith.addf %71, %89 : f32
    %c0_i32_47 = arith.constant 0 : i32
    %c2_i32_48 = arith.constant 2 : i32
    %91 = arith.addi %c0_i32_47, %c2_i32_48 : i32
    %c1_i32_49 = arith.constant 1 : i32
    scf.for %arg10 = %c0_i32_47 to %91 step %c1_i32_49  : i32 {
      %c1_i32_62 = arith.constant 1 : i32
      %114 = arith.muli %arg10, %c1_i32_62 : i32
      %c0_i32_63 = arith.constant 0 : i32
      %115 = arith.addi %c0_i32_63, %114 : i32
      %c8_i32_64 = arith.constant 8 : i32
      %116 = arith.muli %115, %c8_i32_64 : i32
      %c0_i32_65 = arith.constant 0 : i32
      %117 = arith.addi %116, %c0_i32_65 : i32
      %c96_i32 = arith.constant 96 : i32
      %118 = arith.addi %c96_i32, %0 : i32
      %119 = arith.addi %118, %117 : i32
      %120 = arith.index_cast %119 : i32 to index
      %121 = memref.load %arg3[%120] : memref<128xi32, #tpu.memory_space<smem>>
      %122 = arith.index_cast %121 : i32 to index
      %c0_66 = arith.constant 0 : index
      %123 = vector.load %arg5[%122, %c0_66] : memref<64x128xf32, #tpu.memory_space<vmem>>, vector<1x128xf32>
      %124 = arith.index_cast %115 : i32 to index
      %c0_67 = arith.constant 0 : index
      %c0_68 = arith.constant 0 : index
      %125 = vector.load %arg9[%124, %c0_67, %c0_68] : memref<2x8x128xf32, #tpu.memory_space<vmem>>, vector<1x1x128xf32>
      %126 = vector.shape_cast %125 : vector<1x1x128xf32> to vector<1x128xf32>
      %127 = vector.shape_cast %123 : vector<1x128xf32> to vector<1x1x128xf32>
      tpu.vector_store %arg9[%124, %c0_67, %c0_68], %127 {strides = array<i32>} : memref<2x8x128xf32, #tpu.memory_space<vmem>>, vector<1x1x128xf32>,
      %c1_i32_69 = arith.constant 1 : i32
      %128 = arith.addi %116, %c1_i32_69 : i32
      %c96_i32_70 = arith.constant 96 : i32
      %129 = arith.addi %c96_i32_70, %0 : i32
      %130 = arith.addi %129, %128 : i32
      %131 = arith.index_cast %130 : i32 to index
      %132 = memref.load %arg3[%131] : memref<128xi32, #tpu.memory_space<smem>>
      %133 = arith.index_cast %132 : i32 to index
      %c0_71 = arith.constant 0 : index
      %134 = vector.load %arg5[%133, %c0_71] : memref<64x128xf32, #tpu.memory_space<vmem>>, vector<1x128xf32>
      %135 = arith.index_cast %115 : i32 to index
      %c1 = arith.constant 1 : index
      %c0_72 = arith.constant 0 : index
      %136 = vector.load %arg9[%135, %c1, %c0_72] : memref<2x8x128xf32, #tpu.memory_space<vmem>>, vector<1x1x128xf32>
      %137 = vector.shape_cast %136 : vector<1x1x128xf32> to vector<1x128xf32>
      %138 = vector.shape_cast %134 : vector<1x128xf32> to vector<1x1x128xf32>
      tpu.vector_store %arg9[%135, %c1, %c0_72], %138 {strides = array<i32>} : memref<2x8x128xf32, #tpu.memory_space<vmem>>, vector<1x1x128xf32>,
      %c2_i32_73 = arith.constant 2 : i32
      %139 = arith.addi %116, %c2_i32_73 : i32
      %c96_i32_74 = arith.constant 96 : i32
      %140 = arith.addi %c96_i32_74, %0 : i32
      %141 = arith.addi %140, %139 : i32
      %142 = arith.index_cast %141 : i32 to index
      %143 = memref.load %arg3[%142] : memref<128xi32, #tpu.memory_space<smem>>
      %144 = arith.index_cast %143 : i32 to index
      %c0_75 = arith.constant 0 : index
      %145 = vector.load %arg5[%144, %c0_75] : memref<64x128xf32, #tpu.memory_space<vmem>>, vector<1x128xf32>
      %146 = arith.index_cast %115 : i32 to index
      %c2 = arith.constant 2 : index
      %c0_76 = arith.constant 0 : index
      %147 = vector.load %arg9[%146, %c2, %c0_76] : memref<2x8x128xf32, #tpu.memory_space<vmem>>, vector<1x1x128xf32>
      %148 = vector.shape_cast %147 : vector<1x1x128xf32> to vector<1x128xf32>
      %149 = vector.shape_cast %145 : vector<1x128xf32> to vector<1x1x128xf32>
      tpu.vector_store %arg9[%146, %c2, %c0_76], %149 {strides = array<i32>} : memref<2x8x128xf32, #tpu.memory_space<vmem>>, vector<1x1x128xf32>,
      %c3_i32 = arith.constant 3 : i32
      %150 = arith.addi %116, %c3_i32 : i32
      %c96_i32_77 = arith.constant 96 : i32
      %151 = arith.addi %c96_i32_77, %0 : i32
      %152 = arith.addi %151, %150 : i32
      %153 = arith.index_cast %152 : i32 to index
      %154 = memref.load %arg3[%153] : memref<128xi32, #tpu.memory_space<smem>>
      %155 = arith.index_cast %154 : i32 to index
      %c0_78 = arith.constant 0 : index
      %156 = vector.load %arg5[%155, %c0_78] : memref<64x128xf32, #tpu.memory_space<vmem>>, vector<1x128xf32>
      %157 = arith.index_cast %115 : i32 to index
      %c3 = arith.constant 3 : index
      %c0_79 = arith.constant 0 : index
      %158 = vector.load %arg9[%157, %c3, %c0_79] : memref<2x8x128xf32, #tpu.memory_space<vmem>>, vector<1x1x128xf32>
      %159 = vector.shape_cast %158 : vector<1x1x128xf32> to vector<1x128xf32>
      %160 = vector.shape_cast %156 : vector<1x128xf32> to vector<1x1x128xf32>
      tpu.vector_store %arg9[%157, %c3, %c0_79], %160 {strides = array<i32>} : memref<2x8x128xf32, #tpu.memory_space<vmem>>, vector<1x1x128xf32>,
      %c4_i32 = arith.constant 4 : i32
      %161 = arith.addi %116, %c4_i32 : i32
      %c96_i32_80 = arith.constant 96 : i32
      %162 = arith.addi %c96_i32_80, %0 : i32
      %163 = arith.addi %162, %161 : i32
      %164 = arith.index_cast %163 : i32 to index
      %165 = memref.load %arg3[%164] : memref<128xi32, #tpu.memory_space<smem>>
      %166 = arith.index_cast %165 : i32 to index
      %c0_81 = arith.constant 0 : index
      %167 = vector.load %arg5[%166, %c0_81] : memref<64x128xf32, #tpu.memory_space<vmem>>, vector<1x128xf32>
      %168 = arith.index_cast %115 : i32 to index
      %c4 = arith.constant 4 : index
      %c0_82 = arith.constant 0 : index
      %169 = vector.load %arg9[%168, %c4, %c0_82] : memref<2x8x128xf32, #tpu.memory_space<vmem>>, vector<1x1x128xf32>
      %170 = vector.shape_cast %169 : vector<1x1x128xf32> to vector<1x128xf32>
      %171 = vector.shape_cast %167 : vector<1x128xf32> to vector<1x1x128xf32>
      tpu.vector_store %arg9[%168, %c4, %c0_82], %171 {strides = array<i32>} : memref<2x8x128xf32, #tpu.memory_space<vmem>>, vector<1x1x128xf32>,
      %c5_i32 = arith.constant 5 : i32
      %172 = arith.addi %116, %c5_i32 : i32
      %c96_i32_83 = arith.constant 96 : i32
      %173 = arith.addi %c96_i32_83, %0 : i32
      %174 = arith.addi %173, %172 : i32
      %175 = arith.index_cast %174 : i32 to index
      %176 = memref.load %arg3[%175] : memref<128xi32, #tpu.memory_space<smem>>
      %177 = arith.index_cast %176 : i32 to index
      %c0_84 = arith.constant 0 : index
      %178 = vector.load %arg5[%177, %c0_84] : memref<64x128xf32, #tpu.memory_space<vmem>>, vector<1x128xf32>
      %179 = arith.index_cast %115 : i32 to index
      %c5 = arith.constant 5 : index
      %c0_85 = arith.constant 0 : index
      %180 = vector.load %arg9[%179, %c5, %c0_85] : memref<2x8x128xf32, #tpu.memory_space<vmem>>, vector<1x1x128xf32>
      %181 = vector.shape_cast %180 : vector<1x1x128xf32> to vector<1x128xf32>
      %182 = vector.shape_cast %178 : vector<1x128xf32> to vector<1x1x128xf32>
      tpu.vector_store %arg9[%179, %c5, %c0_85], %182 {strides = array<i32>} : memref<2x8x128xf32, #tpu.memory_space<vmem>>, vector<1x1x128xf32>,
      %c6_i32 = arith.constant 6 : i32
      %183 = arith.addi %116, %c6_i32 : i32
      %c96_i32_86 = arith.constant 96 : i32
      %184 = arith.addi %c96_i32_86, %0 : i32
      %185 = arith.addi %184, %183 : i32
      %186 = arith.index_cast %185 : i32 to index
      %187 = memref.load %arg3[%186] : memref<128xi32, #tpu.memory_space<smem>>
      %188 = arith.index_cast %187 : i32 to index
      %c0_87 = arith.constant 0 : index
      %189 = vector.load %arg5[%188, %c0_87] : memref<64x128xf32, #tpu.memory_space<vmem>>, vector<1x128xf32>
      %190 = arith.index_cast %115 : i32 to index
      %c6 = arith.constant 6 : index
      %c0_88 = arith.constant 0 : index
      %191 = vector.load %arg9[%190, %c6, %c0_88] : memref<2x8x128xf32, #tpu.memory_space<vmem>>, vector<1x1x128xf32>
      %192 = vector.shape_cast %191 : vector<1x1x128xf32> to vector<1x128xf32>
      %193 = vector.shape_cast %189 : vector<1x128xf32> to vector<1x1x128xf32>
      tpu.vector_store %arg9[%190, %c6, %c0_88], %193 {strides = array<i32>} : memref<2x8x128xf32, #tpu.memory_space<vmem>>, vector<1x1x128xf32>,
      %c7_i32 = arith.constant 7 : i32
      %194 = arith.addi %116, %c7_i32 : i32
      %c96_i32_89 = arith.constant 96 : i32
      %195 = arith.addi %c96_i32_89, %0 : i32
      %196 = arith.addi %195, %194 : i32
      %197 = arith.index_cast %196 : i32 to index
      %198 = memref.load %arg3[%197] : memref<128xi32, #tpu.memory_space<smem>>
      %199 = arith.index_cast %198 : i32 to index
      %c0_90 = arith.constant 0 : index
      %200 = vector.load %arg5[%199, %c0_90] : memref<64x128xf32, #tpu.memory_space<vmem>>, vector<1x128xf32>
      %201 = arith.index_cast %115 : i32 to index
      %c7 = arith.constant 7 : index
      %c0_91 = arith.constant 0 : index
      %202 = vector.load %arg9[%201, %c7, %c0_91] : memref<2x8x128xf32, #tpu.memory_space<vmem>>, vector<1x1x128xf32>
      %203 = vector.shape_cast %202 : vector<1x1x128xf32> to vector<1x128xf32>
      %204 = vector.shape_cast %200 : vector<1x128xf32> to vector<1x1x128xf32>
      tpu.vector_store %arg9[%201, %c7, %c0_91], %204 {strides = array<i32>} : memref<2x8x128xf32, #tpu.memory_space<vmem>>, vector<1x1x128xf32>,
    }
    %c2_i32_50 = arith.constant 2 : i32
    %c0_51 = arith.constant 0 : index
    %c0_52 = arith.constant 0 : index
    %c0_53 = arith.constant 0 : index
    %92 = vector.load %arg9[%c0_51, %c0_52, %c0_53] : memref<2x8x128xf32, #tpu.memory_space<vmem>>, vector<2x8x128xf32>
    %93 = arith.mulf %3, %92 : vector<2x8x128xf32>
    %cst_54 = arith.constant dense<0.000000e+00> : vector<2x8xf32>
    %94 = vector.multi_reduction <add>, %93, %cst_54 [2] : vector<2x8x128xf32> to vector<2x8xf32>
    %95 = vector.shape_cast %94 : vector<2x8xf32> to vector<2x8x1xf32>
    %cst_55 = arith.constant 0.000000e+00 : f32
    %96 = vector.broadcast %cst_55 : f32 to vector<2x8x1xf32>
    %97 = arith.maximumf %95, %96 : vector<2x8x1xf32>
    %98 = math.absf %95 : vector<2x8x1xf32>
    %cst_56 = arith.constant 0.000000e+00 : f32
    %99 = vector.broadcast %cst_56 : f32 to vector<2x8x1xf32>
    %100 = arith.subf %99, %98 : vector<2x8x1xf32>
    %101 = math.exp %100 : vector<2x8x1xf32>
    %102 = math.log1p %101 : vector<2x8x1xf32>
    %103 = arith.addf %97, %102 : vector<2x8x1xf32>
    %104 = arith.mulf %103, %15 : vector<2x8x1xf32>
    %105 = vector.shape_cast %104 : vector<2x8x1xf32> to vector<1x2x8x1xf32>
    %cst_57 = arith.constant dense<0.000000e+00> : vector<1xf32>
    %106 = vector.multi_reduction <add>, %105, %cst_57 [1, 2, 3] : vector<1x2x8x1xf32> to vector<1xf32>
    %107 = vector.shape_cast %106 : vector<1xf32> to vector<1x1x1x1xf32>
    %108 = vector.extract %107[0, 0, 0, 0] : f32 from vector<1x1x1x1xf32>
    %109 = arith.addf %90, %108 : f32
    %cst_58 = arith.constant 0.000000e+00 : f32
    %110 = vector.broadcast %cst_58 : f32 to vector<1x8x128xf32>
    %111 = vector.broadcast %109 : f32 to vector<1x8x128xf32>
    %112 = arith.addf %110, %111 : vector<1x8x128xf32>
    %c0_59 = arith.constant 0 : index
    %c0_60 = arith.constant 0 : index
    %c0_61 = arith.constant 0 : index
    %113 = vector.load %arg6[%c0_59, %c0_60, %c0_61] : memref<1x8x128xf32, #tpu.memory_space<vmem>>, vector<1x8x128xf32>
    tpu.vector_store %arg6[%c0_59, %c0_60, %c0_61], %112 {strides = array<i32>} : memref<1x8x128xf32, #tpu.memory_space<vmem>>, vector<1x8x128xf32>,
    return
  }
  func.func @transform_0(%arg0: i32, %arg1: memref<32xi32, #tpu.memory_space<smem>>, %arg2: memref<32xi32, #tpu.memory_space<smem>>, %arg3: memref<128xi32, #tpu.memory_space<smem>>) -> (i32, i32) {
    %c0_i32 = arith.constant 0 : i32
    %c0_i32_0 = arith.constant 0 : i32
    %c0_i32_1 = arith.constant 0 : i32
    return %c0_i32, %c0_i32_0 : i32, i32
  }
  func.func @transform_1(%arg0: i32, %arg1: memref<32xi32, #tpu.memory_space<smem>>, %arg2: memref<32xi32, #tpu.memory_space<smem>>, %arg3: memref<128xi32, #tpu.memory_space<smem>>) -> (i32, i32) {
    %c0_i32 = arith.constant 0 : i32
    %c0_i32_0 = arith.constant 0 : i32
    %c0_i32_1 = arith.constant 0 : i32
    return %c0_i32, %c0_i32_0 : i32, i32
  }
  func.func @transform_2(%arg0: i32, %arg1: memref<32xi32, #tpu.memory_space<smem>>, %arg2: memref<32xi32, #tpu.memory_space<smem>>, %arg3: memref<128xi32, #tpu.memory_space<smem>>) -> (i32, i32, i32) {
    %c0_i32 = arith.constant 0 : i32
    %c0_i32_0 = arith.constant 0 : i32
    %c0_i32_1 = arith.constant 0 : i32
    return %arg0, %c0_i32, %c0_i32_0 : i32, i32, i32
  }
}

</mosaic_0001>

<llo_original>
// kernel: tpu_custom_call.1
$region0: #{tpu_custom_call.1}
  #allocation0 [shape = 'u32[]', space=smem, size = 0x4, offset = 0x4, fixed_abs, tag = 'smem constant byte address 0x4 - core index']
  #allocation1 [shape = 'u32[72,128]{1,0:T(1,128)}', space=vmem, size = 0x9000, scoped, tag = 'internal scratch']
  #allocation2 [shape = 'f32[2,8,128]{2,1,0:T(8,128)}', space=vmem, size = 0x2000, scoped, tag = 'scratch operand']
  #allocation3 [shape = 'f32[2,8,128]{2,1,0:T(8,128)}', space=vmem, size = 0x2000, scoped, tag = 'scratch operand']
  #allocation4 [shape = 'f32[2,8,128]{2,1,0:T(8,128)}', space=vmem, size = 0x2000, scoped, tag = 'scratch operand']
  #allocation5 [shape = 's32[1]{0}', space=sflag, size = 0x4, scoped, tag = 'scoped memory for tpu_custom_call.1']
  #allocation6 [shape = 'u8[512]{0}', space=smem, size = 0x200, scoped, tag = 'prefetched SMEM operand 0']
  #allocation7 [shape = 'u8[512]{0}', space=smem, size = 0x200, scoped, tag = 'prefetched SMEM operand 1']
  #allocation8 [shape = 'u8[512]{0}', space=smem, size = 0x200, scoped, tag = 'prefetched SMEM operand 2']
  %s0 = inlined_call_operand.hbm [shape: s32[32], index: 0, kind: input, shape index: {}]
  %s1 = inlined_call_operand.hbm [shape: s32[32], index: 1, kind: input, shape index: {}]
  %s2 = inlined_call_operand.vmem [shape: s32[128], index: 2, kind: input, shape index: {}]
  %s3 = inlined_call_operand.hbm [shape: f32[64,128], index: 3, kind: input, shape index: {}]
  %s4 = inlined_call_operand.hbm [shape: f32[64,128], index: 4, kind: input, shape index: {}]
  %s5 = inlined_call_operand.hbm [shape: f32[2,8,128], index: 5, kind: output, shape index: {}]
  %s6 = sld [smem:[#allocation0]]
  $region91: #{tpu_custom_call.1} parent=0
    _
  %s8 = ssub.s32 1, %s6
  %s9 = scalar_select 0, %s8, %s6
  %s11 = sshll.u32 %s0, 4
  %s12 = int_to_ptr.hbm [resolvable:$true] %s11
  %14 = dma.hbm_to_smem %s12, 16, [#allocation6], [#allocation5]
  %s16 = sshll.u32 %s1, 4
  %s17 = int_to_ptr.hbm [resolvable:$true] %s16
  %19 = dma.hbm_to_smem %s17, 16, [#allocation7], [#allocation5]
  %s21 = sshll.u32 %s2, 4
  %s22 = int_to_ptr.vmem [resolvable:$true] %s21
  %24 = dma.vmem_to_smem %s22, 16, [#allocation8], [#allocation5]
  %26 = dma.done [#allocation5], 48
  %27 = sfence
  $region1: #{tpu_custom_call.1} parent=0
    #allocation9 [shape = 'u8[32768]{0}', space=vmem, size = 0x8000, scoped, tag = 'input window, operand 3, single buffered']
    #allocation10 [shape = 's32[2]{0}', space=sflag, size = 0x8, scoped, tag = 'scoped memory for tpu_custom_call.1']
    #allocation11 [shape = 's32[2]{0}', space=sflag, size = 0x8, scoped, tag = 'scoped memory for tpu_custom_call.1']
    #allocation12 [shape = 'u8[32768]{0}', space=vmem, size = 0x8000, scoped, tag = 'input window, operand 4, single buffered']
    #allocation13 [shape = 's32[1]{0}', space=sflag, size = 0x4, scoped, tag = 'scoped memory for tpu_custom_call.1']
    #allocation14 [shape = 'u8[8192]{0}', space=vmem, size = 0x2000, scoped, tag = 'output window, operand 0']
    %28 = vsyncpa [#allocation10], 0
    %29 = vsyncpa [#allocation13], 0
    %30 = vsyncpa [#allocation11], 0
    %s31 = scalar_lea.sflag [#allocation11], 1
    %32 = vsyncpa %s31, 0
    loop: start=0, step=1, limit=4
    $region2: #{tpu_custom_call.1} parent=1 // loop_pre_header
      _
    $region3: #{tpu_custom_call.1} parent=1 // loop_header
      %s34 = sphi 0, %s38
      %p35 = scmp.ge.s32.totalorder %s34, 4
      %s42 = sphi 0, %s42
      %s44 = sphi 0, %s42
      %s45 = sphi 0, %s44
      %s59 = sphi 0, %s45
      %s63 = sphi 0, %s63
      %s65 = sphi 0, %s63
      %s66 = sphi 0, %s65
      %s80 = sphi 0, %s66
      %s86 = sphi 0, %s88
      %s89 = sphi 0, %s86
      %s90 = sphi 0, %s89
      %s106 = sphi 0, %s90
    $region4: #{tpu_custom_call.1} parent=1 // loop_header_branch
      %37 = sbr.rel (%p35) target = $region8
    $region5: #{tpu_custom_call.1} parent=1 // loop_body
      %s39 = ssub.s32 %s34, 1
      %s40 = ssub.s32 %s34, 2
      %s41 = sadd.s32 %s34, 1
      %s43 = sadd.s32 %s42, 1
      %p46 = scmp.eq.s32.totalorder %s34, 1
      %p47 = scmp.ne.s32.totalorder %s42, %s44
      %p48 = scmp.eq.s32.totalorder %s34, 0
      %p49 = por %p47, %p48
      %p50 = scmp.ne.s32.totalorder %s42, %s44
      %p51 = scmp.eq.s32.totalorder %s39, 1
      %p52 = por %p50, %p51
      %p53 = scmp.ne.s32.totalorder %s44, %s45
      %p54 = scmp.eq.s32.totalorder %s39, 0
      %p55 = por %p53, %p54
      %p56 = scmp.ne.s32.totalorder %s44, %s45
      %p57 = scmp.eq.s32.totalorder %s40, 1
      %p58 = por %p56, %p57
      %p60 = scmp.ne.s32.totalorder %s45, %s59
      %p61 = scmp.eq.s32.totalorder %s40, 0
      %p62 = por %p60, %p61
      %s64 = sadd.s32 %s63, 1
      %p67 = scmp.eq.s32.totalorder %s34, 1
      %p68 = scmp.ne.s32.totalorder %s63, %s65
      %p69 = scmp.eq.s32.totalorder %s34, 0
      %p70 = por %p68, %p69
      %p71 = scmp.ne.s32.totalorder %s63, %s65
      %p72 = scmp.eq.s32.totalorder %s39, 1
      %p73 = por %p71, %p72
      %p74 = scmp.ne.s32.totalorder %s65, %s66
      %p75 = scmp.eq.s32.totalorder %s39, 0
      %p76 = por %p74, %p75
      %p77 = scmp.ne.s32.totalorder %s65, %s66
      %p78 = scmp.eq.s32.totalorder %s40, 1
      %p79 = por %p77, %p78
      %p81 = scmp.ne.s32.totalorder %s66, %s80
      %p82 = scmp.eq.s32.totalorder %s40, 0
      %p83 = por %p81, %p82
      %s84 = ssub.s32 %s34, %s41
      %p85 = scmp.eq.s32.totalorder %s84, 0
      %s87 = sadd.s32 %s86, 1
      %s88 = scalar_select %p85, %s86, %s87
      %p91 = pneg %p85
      %p92 = scmp.eq.s32.totalorder %s34, 1
      %p93 = por %p91, %p92
      %p94 = scmp.ne.s32.totalorder %s86, %s89
      %p95 = scmp.eq.s32.totalorder %s34, 0
      %p96 = por %p94, %p95
      %p97 = scmp.ne.s32.totalorder %s86, %s89
      %p98 = scmp.eq.s32.totalorder %s39, 1
      %p99 = por %p97, %p98
      %p100 = scmp.ne.s32.totalorder %s89, %s90
      %p101 = scmp.eq.s32.totalorder %s39, 0
      %p102 = por %p100, %p101
      %p103 = scmp.ne.s32.totalorder %s89, %s90
      %p104 = scmp.eq.s32.totalorder %s40, 1
      %p105 = por %p103, %p104
      %p107 = scmp.ne.s32.totalorder %s90, %s106
      %p108 = scmp.eq.s32.totalorder %s40, 0
      %p109 = por %p107, %p108
      %p110 = scmp.le.s32.totalorder 1, %s34
      %p111 = scmp.lt.s32.totalorder %s34, 3
      %p112 = pnand %p110, %p111
      %p113 = pneg %p112
      // Predicated region
      $region9: #{tpu_custom_call.1} parent=5 // pred_check
        _
      $region10: #{tpu_custom_call.1} parent=5 // pred_check_branch
        %115 = sbr.rel (%p112) target = $region12
      $region11: #{tpu_custom_call.1} parent=5 // pred_region
        %s116 = ssub.s32 %s34, 1
        // Predicated region
        $region13: #{tpu_custom_call.1} parent=11 // pred_check
          %p117 = pneg %p55
        $region14: #{tpu_custom_call.1} parent=11 // pred_check_branch
          %119 = sbr.rel (%p117) target = $region16
        $region15: #{tpu_custom_call.1} parent=11 // pred_region
          %121 = vsyncadd [#allocation10], 0
          %s122 = sshll.u32 %s3, 4
          %s123 = int_to_ptr.hbm [resolvable:$true] %s122
          %s124 = sshll.u32 [#allocation9], 4
          %s125 = int_to_ptr.vmem [resolvable:$true] %s124
          %130 = dma.hbm_to_vmem [thread:$0]  %s123, 1024, %s125, [#allocation10], 128, 128, 8
        $region16: #{tpu_custom_call.1} parent=11 // pred_fallthru
          _
        // Predicated region
        $region17: #{tpu_custom_call.1} parent=11 // pred_check
          %p131 = pneg %p76
        $region18: #{tpu_custom_call.1} parent=11 // pred_check_branch
          %133 = sbr.rel (%p131) target = $region20
        $region19: #{tpu_custom_call.1} parent=11 // pred_region
          %135 = vsyncadd [#allocation13], 0
          %s136 = sshll.u32 %s4, 4
          %s137 = int_to_ptr.hbm [resolvable:$true] %s136
          %s138 = sshll.u32 [#allocation12], 4
          %s139 = int_to_ptr.vmem [resolvable:$true] %s138
          %144 = dma.hbm_to_vmem [thread:$0]  %s137, 1024, %s139, [#allocation13], 128, 128, 8
        $region20: #{tpu_custom_call.1} parent=11 // pred_fallthru
          _
      $region12: #{tpu_custom_call.1} parent=5 // pred_fallthru
        _
      %p145 = scmp.lt.s32.totalorder %s34, 2
      // Predicated region
      $region21: #{tpu_custom_call.1} parent=5 // pred_check
        %p146 = pneg %p145
      $region22: #{tpu_custom_call.1} parent=5 // pred_check_branch
        %148 = sbr.rel (%p146) target = $region24
      $region23: #{tpu_custom_call.1} parent=5 // pred_region
        _
      $region24: #{tpu_custom_call.1} parent=5 // pred_fallthru
        _
      %p149 = scmp.le.s32.totalorder 1, %s34
      %p150 = scmp.lt.s32.totalorder %s34, 3
      %p151 = pnand %p149, %p150
      %p152 = pneg %p151
      // Predicated region
      $region25: #{tpu_custom_call.1} parent=5 // pred_check
        _
      $region26: #{tpu_custom_call.1} parent=5 // pred_check_branch
        %154 = sbr.rel (%p151) target = $region28
      $region27: #{tpu_custom_call.1} parent=5 // pred_region
        %s155 = ssub.s32 %s34, 1
        // Predicated region
        $region29: #{tpu_custom_call.1} parent=27 // pred_check
          %p156 = pneg %p55
        $region30: #{tpu_custom_call.1} parent=27 // pred_check_branch
          %158 = sbr.rel (%p156) target = $region32
        $region31: #{tpu_custom_call.1} parent=27 // pred_region
          %160 = dma.done [#allocation10], 1024
        $region32: #{tpu_custom_call.1} parent=27 // pred_fallthru
          _
        // Predicated region
        $region33: #{tpu_custom_call.1} parent=27 // pred_check
          %p161 = pneg %p76
        $region34: #{tpu_custom_call.1} parent=27 // pred_check_branch
          %163 = sbr.rel (%p161) target = $region36
        $region35: #{tpu_custom_call.1} parent=27 // pred_region
          %165 = dma.done [#allocation13], 1024
        $region36: #{tpu_custom_call.1} parent=27 // pred_fallthru
          _
        %p166 = pneg %p55
        %p167 = pneg %p52
        %p168 = pneg %p76
        %p169 = pneg %p73
        %p170 = pneg %p102
        %p171 = pneg %p99
        %s172 = sand.u32 %s89, 1
        %s173 = scalar_lea.sflag [#allocation11], %s172
        %s174 = sand.u32 %s89, 1
        %s175 = smul.addr %s174, 8
        %s176 = scalar_lea.vmem [#allocation14], %s175
        %s177 = smul.u32 %s39, 16
        loop: start=0, step=1, limit=2
        $region37: #{tpu_custom_call.1} parent=27 // loop_pre_header
          _
        $region38: #{tpu_custom_call.1} parent=27 // loop_header
          %s179 = sphi 0, %s183
          %p180 = scmp.ge.s32.totalorder %s179, 2
        $region39: #{tpu_custom_call.1} parent=27 // loop_header_branch
          %182 = sbr.rel (%p180) target = $region43
        $region40: #{tpu_custom_call.1} parent=27 // loop_body
          %s184 = smul.u32 %s179, 8
          %s185 = sadd.s32 %s177, %s184
          %s186 = sld [smem:[#allocation6 + %s185]]
          %s187 = scalar_lea.vmem [#allocation9], %s186
          %v188 = vld [vmem:[%s187] sm:$0x1]
          %s189 = scalar_lea.vmem [#allocation2], %s184
          %190 = vst [vmem:[%s189] sm:$0x1] %v188
          %s191 = sadd.s32 %s184, 1
          %s192 = sadd.s32 %s177, %s191
          %s193 = sld [smem:[#allocation6 + %s192]]
          %s194 = scalar_lea.vmem [#allocation9], %s193
          %v195 = vld [vmem:[%s194] sm:$0x1]
          %196 = vst [vmem:[%s189 + $0x1] sm:$0x1] %v195
          %s197 = sadd.s32 %s184, 2
          %s198 = sadd.s32 %s177, %s197
          %s199 = sld [smem:[#allocation6 + %s198]]
          %s200 = scalar_lea.vmem [#allocation9], %s199
          %v201 = vld [vmem:[%s200] sm:$0x1]
          %202 = vst [vmem:[%s189 + $0x2] sm:$0x1] %v201
          %s203 = sadd.s32 %s184, 3
          %s204 = sadd.s32 %s177, %s203
          %s205 = sld [smem:[#allocation6 + %s204]]
          %s206 = scalar_lea.vmem [#allocation9], %s205
          %v207 = vld [vmem:[%s206] sm:$0x1]
          %208 = vst [vmem:[%s189 + $0x3] sm:$0x1] %v207
          %s209 = sadd.s32 %s184, 4
          %s210 = sadd.s32 %s177, %s209
          %s211 = sld [smem:[#allocation6 + %s210]]
          %s212 = scalar_lea.vmem [#allocation9], %s211
          %v213 = vld [vmem:[%s212] sm:$0x1]
          %214 = vst [vmem:[%s189 + $0x4] sm:$0x1] %v213
          %s215 = sadd.s32 %s184, 5
          %s216 = sadd.s32 %s177, %s215
          %s217 = sld [smem:[#allocation6 + %s216]]
          %s218 = scalar_lea.vmem [#allocation9], %s217
          %v219 = vld [vmem:[%s218] sm:$0x1]
          %220 = vst [vmem:[%s189 + $0x5] sm:$0x1] %v219
          %s221 = sadd.s32 %s184, 6
          %s222 = sadd.s32 %s177, %s221
          %s223 = sld [smem:[#allocation6 + %s222]]
          %s224 = scalar_lea.vmem [#allocation9], %s223
          %v225 = vld [vmem:[%s224] sm:$0x1]
          %226 = vst [vmem:[%s189 + $0x6] sm:$0x1] %v225
          %s227 = sadd.s32 %s184, 7
          %s228 = sadd.s32 %s177, %s227
          %s229 = sld [smem:[#allocation6 + %s228]]
          %s230 = scalar_lea.vmem [#allocation9], %s229
          %v231 = vld [vmem:[%s230] sm:$0x1]
          %232 = vst [vmem:[%s189 + $0x7] sm:$0x1] %v231
        $region41: #{tpu_custom_call.1} parent=27 // loop_footer
          %s183 = sadd.s32 1, %s179
        $region42: #{tpu_custom_call.1} parent=27 // loop_footer_branch
          %178 = sbr.rel target = $region38
        $region43: #{tpu_custom_call.1} parent=27 // loop_exit
          _
        loop: start=0, step=1, limit=2
        $region44: #{tpu_custom_call.1} parent=27 // loop_pre_header
          _
        $region45: #{tpu_custom_call.1} parent=27 // loop_header
          %s234 = sphi 0, %s238
          %p235 = scmp.ge.s32.totalorder %s234, 2
        $region46: #{tpu_custom_call.1} parent=27 // loop_header_branch
          %237 = sbr.rel (%p235) target = $region50
        $region47: #{tpu_custom_call.1} parent=27 // loop_body
          %s239 = smul.u32 %s234, 8
          %s240 = sadd.s32 %s177, %s239
          %s241 = sld [smem:[#allocation7 + %s240]]
          %s242 = scalar_lea.vmem [#allocation12], %s241
          %v243 = vld [vmem:[%s242] sm:$0x1]
          %s244 = scalar_lea.vmem [#allocation3], %s239
          %245 = vst [vmem:[%s244] sm:$0x1] %v243
          %s246 = sadd.s32 %s239, 1
          %s247 = sadd.s32 %s177, %s246
          %s248 = sld [smem:[#allocation7 + %s247]]
          %s249 = scalar_lea.vmem [#allocation12], %s248
          %v250 = vld [vmem:[%s249] sm:$0x1]
          %251 = vst [vmem:[%s244 + $0x1] sm:$0x1] %v250
          %s252 = sadd.s32 %s239, 2
          %s253 = sadd.s32 %s177, %s252
          %s254 = sld [smem:[#allocation7 + %s253]]
          %s255 = scalar_lea.vmem [#allocation12], %s254
          %v256 = vld [vmem:[%s255] sm:$0x1]
          %257 = vst [vmem:[%s244 + $0x2] sm:$0x1] %v256
          %s258 = sadd.s32 %s239, 3
          %s259 = sadd.s32 %s177, %s258
          %s260 = sld [smem:[#allocation7 + %s259]]
          %s261 = scalar_lea.vmem [#allocation12], %s260
          %v262 = vld [vmem:[%s261] sm:$0x1]
          %263 = vst [vmem:[%s244 + $0x3] sm:$0x1] %v262
          %s264 = sadd.s32 %s239, 4
          %s265 = sadd.s32 %s177, %s264
          %s266 = sld [smem:[#allocation7 + %s265]]
          %s267 = scalar_lea.vmem [#allocation12], %s266
          %v268 = vld [vmem:[%s267] sm:$0x1]
          %269 = vst [vmem:[%s244 + $0x4] sm:$0x1] %v268
          %s270 = sadd.s32 %s239, 5
          %s271 = sadd.s32 %s177, %s270
          %s272 = sld [smem:[#allocation7 + %s271]]
          %s273 = scalar_lea.vmem [#allocation12], %s272
          %v274 = vld [vmem:[%s273] sm:$0x1]
          %275 = vst [vmem:[%s244 + $0x5] sm:$0x1] %v274
          %s276 = sadd.s32 %s239, 6
          %s277 = sadd.s32 %s177, %s276
          %s278 = sld [smem:[#allocation7 + %s277]]
          %s279 = scalar_lea.vmem [#allocation12], %s278
          %v280 = vld [vmem:[%s279] sm:$0x1]
          %281 = vst [vmem:[%s244 + $0x6] sm:$0x1] %v280
          %s282 = sadd.s32 %s239, 7
          %s283 = sadd.s32 %s177, %s282
          %s284 = sld [smem:[#allocation7 + %s283]]
          %s285 = scalar_lea.vmem [#allocation12], %s284
          %v286 = vld [vmem:[%s285] sm:$0x1]
          %287 = vst [vmem:[%s244 + $0x7] sm:$0x1] %v286
        $region48: #{tpu_custom_call.1} parent=27 // loop_footer
          %s238 = sadd.s32 1, %s234
        $region49: #{tpu_custom_call.1} parent=27 // loop_footer_branch
          %233 = sbr.rel target = $region45
        $region50: #{tpu_custom_call.1} parent=27 // loop_exit
          _
        %v288 = vld [vmem:[#allocation2] sm:$0xff]
        %v289 = vld [vmem:[#allocation2 + $0x8] sm:$0xff]
        %v290 = vld [vmem:[#allocation3] sm:$0xff]
        %v291 = vld [vmem:[#allocation3 + $0x8] sm:$0xff]
        %v292 = vstv %s177
        %v293 = vadd.s32 %v292, 8
        %v294 = vlaneseq
        %v295 = vshrl.u32 %v294, 7
        %v296 = vadd.s32 %v292, %v295
        %v297 = vadd.s32 %v293, %v295
        %vm298 = vcmp.lt.s32.totalorder %v296, 20
        %vm299 = vcmp.lt.s32.totalorder %v297, 20
        %v300 = vsel %vm298, 1, 0
        %v301 = vsel %vm299, 1, 0
        %v302 = vcvt.s32.f32 %v300
        %v303 = vcvt.s32.f32 %v301
        %v304 = vmul.f32 %v288, %v290
        %v305 = vmul.f32 %v289, %v291
        %306 = vadd.xlane.f32.xlu0 %v304
        %v307 = vpop.xlane.xlu0 %306
        %308 = vadd.xlane.f32.xlu0 %v305
        %v309 = vpop.xlane.xlu0 %308
        %v310 = vsub.f32 0.0, %v307
        %v311 = vsub.f32 0.0, %v309
        %v312 = vmax.f32 %v310, 0.0
        %v313 = vmax.f32 %v311, 0.0
        %v314 = vand.u32 2147483647, %v310
        %v315 = vand.u32 2147483647, %v311
        %v316 = vsub.f32 0.0, %v314
        %v317 = vsub.f32 0.0, %v315
        %v318 = vmul.f32 %v316, 1.442695
        %v319 = vpow.pop %v318
        %v320 = vmul.f32 %v317, 1.442695
        %v321 = vpow.pop %v320
        %v322 = vadd.f32 %v319, 1.0
        %v323 = vlog2.pop %v322
        %v324 = vmul.f32 %v323, 0.6931472
        %v325 = vmul.f32 -0.5, %v319
        %v326 = vadd.f32 %v325, 1.0
        %v327 = vmul.f32 %v326, %v319
        %v328 = vand.u32 2147483647, %v319
        %vm329 = vcmp.lt.f32.partialorder %v328, 0.0004427343
        %v330 = vsel %vm329, %v327, %v324
        %v331 = vadd.f32 %v321, 1.0
        %v332 = vlog2.pop %v331
        %v333 = vmul.f32 %v332, 0.6931472
        %v334 = vmul.f32 -0.5, %v321
        %v335 = vadd.f32 %v334, 1.0
        %v336 = vmul.f32 %v335, %v321
        %v337 = vand.u32 2147483647, %v321
        %vm338 = vcmp.lt.f32.partialorder %v337, 0.0004427343
        %v339 = vsel %vm338, %v336, %v333
        %v340 = vadd.f32 %v312, %v330
        %v341 = vadd.f32 %v313, %v339
        %v342 = vmul.f32 %v340, %v302
        %v343 = vmul.f32 %v341, %v303
        %vm344 = vcmask 7168
        %v345 = vsel %vm344, %v342, 0.0
        %v346 = vsel %vm344, %v343, 0.0
        %v347 = vadd.f32 %v345, %v346
        %348 = vadd.xlane.f32.xlu0 %v347
        %v349 = vpop.xlane.xlu0 %348
        %v350 = vrot.slane %v349, 4
        %v351 = vadd.f32 %v349, %v350
        %v352 = vrot.slane %v351, 2
        %v353 = vadd.f32 %v351, %v352
        %v354 = vrot.slane %v353, 1
        %v355 = vadd.f32 %v353, %v354
        %s356 = vtos %v355
        loop: start=0, step=1, limit=2
        $region51: #{tpu_custom_call.1} parent=27 // loop_pre_header
          _
        $region52: #{tpu_custom_call.1} parent=27 // loop_header
          %s358 = sphi 0, %s362
          %p359 = scmp.ge.s32.totalorder %s358, 2
        $region53: #{tpu_custom_call.1} parent=27 // loop_header_branch
          %361 = sbr.rel (%p359) target = $region57
        $region54: #{tpu_custom_call.1} parent=27 // loop_body
          %s363 = smul.u32 %s358, 8
          %s364 = sadd.s32 %s177, %s363
          %s365 = sld [smem:[#allocation8 + %s364]]
          %s366 = scalar_lea.vmem [#allocation12], %s365
          %v367 = vld [vmem:[%s366] sm:$0x1]
          %s368 = scalar_lea.vmem [#allocation4], %s363
          %369 = vst [vmem:[%s368] sm:$0x1] %v367
          %s370 = sadd.s32 %s363, 1
          %s371 = sadd.s32 %s177, %s370
          %s372 = sld [smem:[#allocation8 + %s371]]
          %s373 = scalar_lea.vmem [#allocation12], %s372
          %v374 = vld [vmem:[%s373] sm:$0x1]
          %375 = vst [vmem:[%s368 + $0x1] sm:$0x1] %v374
          %s376 = sadd.s32 %s363, 2
          %s377 = sadd.s32 %s177, %s376
          %s378 = sld [smem:[#allocation8 + %s377]]
          %s379 = scalar_lea.vmem [#allocation12], %s378
          %v380 = vld [vmem:[%s379] sm:$0x1]
          %381 = vst [vmem:[%s368 + $0x2] sm:$0x1] %v380
          %s382 = sadd.s32 %s363, 3
          %s383 = sadd.s32 %s177, %s382
          %s384 = sld [smem:[#allocation8 + %s383]]
          %s385 = scalar_lea.vmem [#allocation12], %s384
          %v386 = vld [vmem:[%s385] sm:$0x1]
          %387 = vst [vmem:[%s368 + $0x3] sm:$0x1] %v386
          %s388 = sadd.s32 %s363, 4
          %s389 = sadd.s32 %s177, %s388
          %s390 = sld [smem:[#allocation8 + %s389]]
          %s391 = scalar_lea.vmem [#allocation12], %s390
          %v392 = vld [vmem:[%s391] sm:$0x1]
          %393 = vst [vmem:[%s368 + $0x4] sm:$0x1] %v392
          %s394 = sadd.s32 %s363, 5
          %s395 = sadd.s32 %s177, %s394
          %s396 = sld [smem:[#allocation8 + %s395]]
          %s397 = scalar_lea.vmem [#allocation12], %s396
          %v398 = vld [vmem:[%s397] sm:$0x1]
          %399 = vst [vmem:[%s368 + $0x5] sm:$0x1] %v398
          %s400 = sadd.s32 %s363, 6
          %s401 = sadd.s32 %s177, %s400
          %s402 = sld [smem:[#allocation8 + %s401]]
          %s403 = scalar_lea.vmem [#allocation12], %s402
          %v404 = vld [vmem:[%s403] sm:$0x1]
          %405 = vst [vmem:[%s368 + $0x6] sm:$0x1] %v404
          %s406 = sadd.s32 %s363, 7
          %s407 = sadd.s32 %s177, %s406
          %s408 = sld [smem:[#allocation8 + %s407]]
          %s409 = scalar_lea.vmem [#allocation12], %s408
          %v410 = vld [vmem:[%s409] sm:$0x1]
          %411 = vst [vmem:[%s368 + $0x7] sm:$0x1] %v410
        $region55: #{tpu_custom_call.1} parent=27 // loop_footer
          %s362 = sadd.s32 1, %s358
        $region56: #{tpu_custom_call.1} parent=27 // loop_footer_branch
          %357 = sbr.rel target = $region52
        $region57: #{tpu_custom_call.1} parent=27 // loop_exit
          _
        %v412 = vld [vmem:[#allocation4] sm:$0xff]
        %v413 = vld [vmem:[#allocation4 + $0x8] sm:$0xff]
        %v414 = vmul.f32 %v288, %v412
        %v415 = vmul.f32 %v289, %v413
        %416 = vadd.xlane.f32.xlu0 %v414
        %v417 = vpop.xlane.xlu0 %416
        %418 = vadd.xlane.f32.xlu0 %v415
        %v419 = vpop.xlane.xlu0 %418
        %v420 = vmax.f32 %v417, 0.0
        %v421 = vmax.f32 %v419, 0.0
        %v422 = vand.u32 2147483647, %v417
        %v423 = vand.u32 2147483647, %v419
        %v424 = vsub.f32 0.0, %v422
        %v425 = vsub.f32 0.0, %v423
        %v426 = vmul.f32 %v424, 1.442695
        %v427 = vpow.pop %v426
        %v428 = vmul.f32 %v425, 1.442695
        %v429 = vpow.pop %v428
        %v430 = vadd.f32 %v427, 1.0
        %v431 = vlog2.pop %v430
        %v432 = vmul.f32 %v431, 0.6931472
        %v433 = vmul.f32 -0.5, %v427
        %v434 = vadd.f32 %v433, 1.0
        %v435 = vmul.f32 %v434, %v427
        %v436 = vand.u32 2147483647, %v427
        %vm437 = vcmp.lt.f32.partialorder %v436, 0.0004427343
        %v438 = vsel %vm437, %v435, %v432
        %v439 = vadd.f32 %v429, 1.0
        %v440 = vlog2.pop %v439
        %v441 = vmul.f32 %v440, 0.6931472
        %v442 = vmul.f32 -0.5, %v429
        %v443 = vadd.f32 %v442, 1.0
        %v444 = vmul.f32 %v443, %v429
        %v445 = vand.u32 2147483647, %v429
        %vm446 = vcmp.lt.f32.partialorder %v445, 0.0004427343
        %v447 = vsel %vm446, %v444, %v441
        %v448 = vadd.f32 %v420, %v438
        %v449 = vadd.f32 %v421, %v447
        %v450 = vmul.f32 %v448, %v302
        %v451 = vmul.f32 %v449, %v303
        %v452 = vsel %vm344, %v450, 0.0
        %v453 = vsel %vm344, %v451, 0.0
        %v454 = vadd.f32 %v452, %v453
        %455 = vadd.xlane.f32.xlu0 %v454
        %v456 = vpop.xlane.xlu0 %455
        %v457 = vrot.slane %v456, 4
        %v458 = vadd.f32 %v456, %v457
        %v459 = vrot.slane %v458, 2
        %v460 = vadd.f32 %v458, %v459
        %v461 = vrot.slane %v460, 1
        %v462 = vadd.f32 %v460, %v461
        %s463 = vtos %v462
        %s464 = sadd.f32 %s356, %s463
        loop: start=0, step=1, limit=2
        $region58: #{tpu_custom_call.1} parent=27 // loop_pre_header
          _
        $region59: #{tpu_custom_call.1} parent=27 // loop_header
          %s466 = sphi 0, %s470
          %p467 = scmp.ge.s32.totalorder %s466, 2
        $region60: #{tpu_custom_call.1} parent=27 // loop_header_branch
          %469 = sbr.rel (%p467) target = $region64
        $region61: #{tpu_custom_call.1} parent=27 // loop_body
          %s471 = smul.u32 %s466, 8
          %s472 = sadd.s32 %s177, 32
          %s473 = sadd.s32 %s472, %s471
          %s474 = sld [smem:[#allocation8 + %s473]]
          %s475 = scalar_lea.vmem [#allocation12], %s474
          %v476 = vld [vmem:[%s475] sm:$0x1]
          %s477 = scalar_lea.vmem [#allocation4], %s471
          %478 = vst [vmem:[%s477] sm:$0x1] %v476
          %s479 = sadd.s32 %s471, 1
          %s480 = sadd.s32 %s472, %s479
          %s481 = sld [smem:[#allocation8 + %s480]]
          %s482 = scalar_lea.vmem [#allocation12], %s481
          %v483 = vld [vmem:[%s482] sm:$0x1]
          %484 = vst [vmem:[%s477 + $0x1] sm:$0x1] %v483
          %s485 = sadd.s32 %s471, 2
          %s486 = sadd.s32 %s472, %s485
          %s487 = sld [smem:[#allocation8 + %s486]]
          %s488 = scalar_lea.vmem [#allocation12], %s487
          %v489 = vld [vmem:[%s488] sm:$0x1]
          %490 = vst [vmem:[%s477 + $0x2] sm:$0x1] %v489
          %s491 = sadd.s32 %s471, 3
          %s492 = sadd.s32 %s472, %s491
          %s493 = sld [smem:[#allocation8 + %s492]]
          %s494 = scalar_lea.vmem [#allocation12], %s493
          %v495 = vld [vmem:[%s494] sm:$0x1]
          %496 = vst [vmem:[%s477 + $0x3] sm:$0x1] %v495
          %s497 = sadd.s32 %s471, 4
          %s498 = sadd.s32 %s472, %s497
          %s499 = sld [smem:[#allocation8 + %s498]]
          %s500 = scalar_lea.vmem [#allocation12], %s499
          %v501 = vld [vmem:[%s500] sm:$0x1]
          %502 = vst [vmem:[%s477 + $0x4] sm:$0x1] %v501
          %s503 = sadd.s32 %s471, 5
          %s504 = sadd.s32 %s472, %s503
          %s505 = sld [smem:[#allocation8 + %s504]]
          %s506 = scalar_lea.vmem [#allocation12], %s505
          %v507 = vld [vmem:[%s506] sm:$0x1]
          %508 = vst [vmem:[%s477 + $0x5] sm:$0x1] %v507
          %s509 = sadd.s32 %s471, 6
          %s510 = sadd.s32 %s472, %s509
          %s511 = sld [smem:[#allocation8 + %s510]]
          %s512 = scalar_lea.vmem [#allocation12], %s511
          %v513 = vld [vmem:[%s512] sm:$0x1]
          %514 = vst [vmem:[%s477 + $0x6] sm:$0x1] %v513
          %s515 = sadd.s32 %s471, 7
          %s516 = sadd.s32 %s472, %s515
          %s517 = sld [smem:[#allocation8 + %s516]]
          %s518 = scalar_lea.vmem [#allocation12], %s517
          %v519 = vld [vmem:[%s518] sm:$0x1]
          %520 = vst [vmem:[%s477 + $0x7] sm:$0x1] %v519
        $region62: #{tpu_custom_call.1} parent=27 // loop_footer
          %s470 = sadd.s32 1, %s466
        $region63: #{tpu_custom_call.1} parent=27 // loop_footer_branch
          %465 = sbr.rel target = $region59
        $region64: #{tpu_custom_call.1} parent=27 // loop_exit
          _
        %v521 = vld [vmem:[#allocation4] sm:$0xff]
        %v522 = vld [vmem:[#allocation4 + $0x8] sm:$0xff]
        %v523 = vmul.f32 %v288, %v521
        %v524 = vmul.f32 %v289, %v522
        %525 = vadd.xlane.f32.xlu0 %v523
        %v526 = vpop.xlane.xlu0 %525
        %527 = vadd.xlane.f32.xlu0 %v524
        %v528 = vpop.xlane.xlu0 %527
        %v529 = vmax.f32 %v526, 0.0
        %v530 = vmax.f32 %v528, 0.0
        %v531 = vand.u32 2147483647, %v526
        %v532 = vand.u32 2147483647, %v528
        %v533 = vsub.f32 0.0, %v531
        %v534 = vsub.f32 0.0, %v532
        %v535 = vmul.f32 %v533, 1.442695
        %v536 = vpow.pop %v535
        %v537 = vmul.f32 %v534, 1.442695
        %v538 = vpow.pop %v537
        %v539 = vadd.f32 %v536, 1.0
        %v540 = vlog2.pop %v539
        %v541 = vmul.f32 %v540, 0.6931472
        %v542 = vmul.f32 -0.5, %v536
        %v543 = vadd.f32 %v542, 1.0
        %v544 = vmul.f32 %v543, %v536
        %v545 = vand.u32 2147483647, %v536
        %vm546 = vcmp.lt.f32.partialorder %v545, 0.0004427343
        %v547 = vsel %vm546, %v544, %v541
        %v548 = vadd.f32 %v538, 1.0
        %v549 = vlog2.pop %v548
        %v550 = vmul.f32 %v549, 0.6931472
        %v551 = vmul.f32 -0.5, %v538
        %v552 = vadd.f32 %v551, 1.0
        %v553 = vmul.f32 %v552, %v538
        %v554 = vand.u32 2147483647, %v538
        %vm555 = vcmp.lt.f32.partialorder %v554, 0.0004427343
        %v556 = vsel %vm555, %v553, %v550
        %v557 = vadd.f32 %v529, %v547
        %v558 = vadd.f32 %v530, %v556
        %v559 = vmul.f32 %v557, %v302
        %v560 = vmul.f32 %v558, %v303
        %v561 = vsel %vm344, %v559, 0.0
        %v562 = vsel %vm344, %v560, 0.0
        %v563 = vadd.f32 %v561, %v562
        %564 = vadd.xlane.f32.xlu0 %v563
        %v565 = vpop.xlane.xlu0 %564
        %v566 = vrot.slane %v565, 4
        %v567 = vadd.f32 %v565, %v566
        %v568 = vrot.slane %v567, 2
        %v569 = vadd.f32 %v567, %v568
        %v570 = vrot.slane %v569, 1
        %v571 = vadd.f32 %v569, %v570
        %s572 = vtos %v571
        %s573 = sadd.f32 %s464, %s572
        loop: start=0, step=1, limit=2
        $region65: #{tpu_custom_call.1} parent=27 // loop_pre_header
          _
        $region66: #{tpu_custom_call.1} parent=27 // loop_header
          %s575 = sphi 0, %s579
          %p576 = scmp.ge.s32.totalorder %s575, 2
        $region67: #{tpu_custom_call.1} parent=27 // loop_header_branch
          %578 = sbr.rel (%p576) target = $region71
        $region68: #{tpu_custom_call.1} parent=27 // loop_body
          %s580 = smul.u32 %s575, 8
          %s581 = sadd.s32 %s177, 64
          %s582 = sadd.s32 %s581, %s580
          %s583 = sld [smem:[#allocation8 + %s582]]
          %s584 = scalar_lea.vmem [#allocation12], %s583
          %v585 = vld [vmem:[%s584] sm:$0x1]
          %s586 = scalar_lea.vmem [#allocation4], %s580
          %587 = vst [vmem:[%s586] sm:$0x1] %v585
          %s588 = sadd.s32 %s580, 1
          %s589 = sadd.s32 %s581, %s588
          %s590 = sld [smem:[#allocation8 + %s589]]
          %s591 = scalar_lea.vmem [#allocation12], %s590
          %v592 = vld [vmem:[%s591] sm:$0x1]
          %593 = vst [vmem:[%s586 + $0x1] sm:$0x1] %v592
          %s594 = sadd.s32 %s580, 2
          %s595 = sadd.s32 %s581, %s594
          %s596 = sld [smem:[#allocation8 + %s595]]
          %s597 = scalar_lea.vmem [#allocation12], %s596
          %v598 = vld [vmem:[%s597] sm:$0x1]
          %599 = vst [vmem:[%s586 + $0x2] sm:$0x1] %v598
          %s600 = sadd.s32 %s580, 3
          %s601 = sadd.s32 %s581, %s600
          %s602 = sld [smem:[#allocation8 + %s601]]
          %s603 = scalar_lea.vmem [#allocation12], %s602
          %v604 = vld [vmem:[%s603] sm:$0x1]
          %605 = vst [vmem:[%s586 + $0x3] sm:$0x1] %v604
          %s606 = sadd.s32 %s580, 4
          %s607 = sadd.s32 %s581, %s606
          %s608 = sld [smem:[#allocation8 + %s607]]
          %s609 = scalar_lea.vmem [#allocation12], %s608
          %v610 = vld [vmem:[%s609] sm:$0x1]
          %611 = vst [vmem:[%s586 + $0x4] sm:$0x1] %v610
          %s612 = sadd.s32 %s580, 5
          %s613 = sadd.s32 %s581, %s612
          %s614 = sld [smem:[#allocation8 + %s613]]
          %s615 = scalar_lea.vmem [#allocation12], %s614
          %v616 = vld [vmem:[%s615] sm:$0x1]
          %617 = vst [vmem:[%s586 + $0x5] sm:$0x1] %v616
          %s618 = sadd.s32 %s580, 6
          %s619 = sadd.s32 %s581, %s618
          %s620 = sld [smem:[#allocation8 + %s619]]
          %s621 = scalar_lea.vmem [#allocation12], %s620
          %v622 = vld [vmem:[%s621] sm:$0x1]
          %623 = vst [vmem:[%s586 + $0x6] sm:$0x1] %v622
          %s624 = sadd.s32 %s580, 7
          %s625 = sadd.s32 %s581, %s624
          %s626 = sld [smem:[#allocation8 + %s625]]
          %s627 = scalar_lea.vmem [#allocation12], %s626
          %v628 = vld [vmem:[%s627] sm:$0x1]
          %629 = vst [vmem:[%s586 + $0x7] sm:$0x1] %v628
        $region69: #{tpu_custom_call.1} parent=27 // loop_footer
          %s579 = sadd.s32 1, %s575
        $region70: #{tpu_custom_call.1} parent=27 // loop_footer_branch
          %574 = sbr.rel target = $region66
        $region71: #{tpu_custom_call.1} parent=27 // loop_exit
          _
        %v630 = vld [vmem:[#allocation4] sm:$0xff]
        %v631 = vld [vmem:[#allocation4 + $0x8] sm:$0xff]
        %v632 = vmul.f32 %v288, %v630
        %v633 = vmul.f32 %v289, %v631
        %634 = vadd.xlane.f32.xlu0 %v632
        %v635 = vpop.xlane.xlu0 %634
        %636 = vadd.xlane.f32.xlu0 %v633
        %v637 = vpop.xlane.xlu0 %636
        %v638 = vmax.f32 %v635, 0.0
        %v639 = vmax.f32 %v637, 0.0
        %v640 = vand.u32 2147483647, %v635
        %v641 = vand.u32 2147483647, %v637
        %v642 = vsub.f32 0.0, %v640
        %v643 = vsub.f32 0.0, %v641
        %v644 = vmul.f32 %v642, 1.442695
        %v645 = vpow.pop %v644
        %v646 = vmul.f32 %v643, 1.442695
        %v647 = vpow.pop %v646
        %v648 = vadd.f32 %v645, 1.0
        %v649 = vlog2.pop %v648
        %v650 = vmul.f32 %v649, 0.6931472
        %v651 = vmul.f32 -0.5, %v645
        %v652 = vadd.f32 %v651, 1.0
        %v653 = vmul.f32 %v652, %v645
        %v654 = vand.u32 2147483647, %v645
        %vm655 = vcmp.lt.f32.partialorder %v654, 0.0004427343
        %v656 = vsel %vm655, %v653, %v650
        %v657 = vadd.f32 %v647, 1.0
        %v658 = vlog2.pop %v657
        %v659 = vmul.f32 %v658, 0.6931472
        %v660 = vmul.f32 -0.5, %v647
        %v661 = vadd.f32 %v660, 1.0
        %v662 = vmul.f32 %v661, %v647
        %v663 = vand.u32 2147483647, %v647
        %vm664 = vcmp.lt.f32.partialorder %v663, 0.0004427343
        %v665 = vsel %vm664, %v662, %v659
        %v666 = vadd.f32 %v638, %v656
        %v667 = vadd.f32 %v639, %v665
        %v668 = vmul.f32 %v666, %v302
        %v669 = vmul.f32 %v667, %v303
        %v670 = vsel %vm344, %v668, 0.0
        %v671 = vsel %vm344, %v669, 0.0
        %v672 = vadd.f32 %v670, %v671
        %673 = vadd.xlane.f32.xlu0 %v672
        %v674 = vpop.xlane.xlu0 %673
        %v675 = vrot.slane %v674, 4
        %v676 = vadd.f32 %v674, %v675
        %v677 = vrot.slane %v676, 2
        %v678 = vadd.f32 %v676, %v677
        %v679 = vrot.slane %v678, 1
        %v680 = vadd.f32 %v678, %v679
        %s681 = vtos %v680
        %s682 = sadd.f32 %s573, %s681
        loop: start=0, step=1, limit=2
        $region72: #{tpu_custom_call.1} parent=27 // loop_pre_header
          _
        $region73: #{tpu_custom_call.1} parent=27 // loop_header
          %s684 = sphi 0, %s688
          %p685 = scmp.ge.s32.totalorder %s684, 2
        $region74: #{tpu_custom_call.1} parent=27 // loop_header_branch
          %687 = sbr.rel (%p685) target = $region78
        $region75: #{tpu_custom_call.1} parent=27 // loop_body
          %s689 = smul.u32 %s684, 8
          %s690 = sadd.s32 %s177, 96
          %s691 = sadd.s32 %s690, %s689
          %s692 = sld [smem:[#allocation8 + %s691]]
          %s693 = scalar_lea.vmem [#allocation12], %s692
          %v694 = vld [vmem:[%s693] sm:$0x1]
          %s695 = scalar_lea.vmem [#allocation4], %s689
          %696 = vst [vmem:[%s695] sm:$0x1] %v694
          %s697 = sadd.s32 %s689, 1
          %s698 = sadd.s32 %s690, %s697
          %s699 = sld [smem:[#allocation8 + %s698]]
          %s700 = scalar_lea.vmem [#allocation12], %s699
          %v701 = vld [vmem:[%s700] sm:$0x1]
          %702 = vst [vmem:[%s695 + $0x1] sm:$0x1] %v701
          %s703 = sadd.s32 %s689, 2
          %s704 = sadd.s32 %s690, %s703
          %s705 = sld [smem:[#allocation8 + %s704]]
          %s706 = scalar_lea.vmem [#allocation12], %s705
          %v707 = vld [vmem:[%s706] sm:$0x1]
          %708 = vst [vmem:[%s695 + $0x2] sm:$0x1] %v707
          %s709 = sadd.s32 %s689, 3
          %s710 = sadd.s32 %s690, %s709
          %s711 = sld [smem:[#allocation8 + %s710]]
          %s712 = scalar_lea.vmem [#allocation12], %s711
          %v713 = vld [vmem:[%s712] sm:$0x1]
          %714 = vst [vmem:[%s695 + $0x3] sm:$0x1] %v713
          %s715 = sadd.s32 %s689, 4
          %s716 = sadd.s32 %s690, %s715
          %s717 = sld [smem:[#allocation8 + %s716]]
          %s718 = scalar_lea.vmem [#allocation12], %s717
          %v719 = vld [vmem:[%s718] sm:$0x1]
          %720 = vst [vmem:[%s695 + $0x4] sm:$0x1] %v719
          %s721 = sadd.s32 %s689, 5
          %s722 = sadd.s32 %s690, %s721
          %s723 = sld [smem:[#allocation8 + %s722]]
          %s724 = scalar_lea.vmem [#allocation12], %s723
          %v725 = vld [vmem:[%s724] sm:$0x1]
          %726 = vst [vmem:[%s695 + $0x5] sm:$0x1] %v725
          %s727 = sadd.s32 %s689, 6
          %s728 = sadd.s32 %s690, %s727
          %s729 = sld [smem:[#allocation8 + %s728]]
          %s730 = scalar_lea.vmem [#allocation12], %s729
          %v731 = vld [vmem:[%s730] sm:$0x1]
          %732 = vst [vmem:[%s695 + $0x6] sm:$0x1] %v731
          %s733 = sadd.s32 %s689, 7
          %s734 = sadd.s32 %s690, %s733
          %s735 = sld [smem:[#allocation8 + %s734]]
          %s736 = scalar_lea.vmem [#allocation12], %s735
          %v737 = vld [vmem:[%s736] sm:$0x1]
          %738 = vst [vmem:[%s695 + $0x7] sm:$0x1] %v737
        $region76: #{tpu_custom_call.1} parent=27 // loop_footer
          %s688 = sadd.s32 1, %s684
        $region77: #{tpu_custom_call.1} parent=27 // loop_footer_branch
          %683 = sbr.rel target = $region73
        $region78: #{tpu_custom_call.1} parent=27 // loop_exit
          _
        %v739 = vld [vmem:[#allocation4] sm:$0xff]
        %v740 = vld [vmem:[#allocation4 + $0x8] sm:$0xff]
        %v741 = vmul.f32 %v288, %v739
        %v742 = vmul.f32 %v289, %v740
        %743 = vadd.xlane.f32.xlu0 %v741
        %v744 = vpop.xlane.xlu0 %743
        %745 = vadd.xlane.f32.xlu0 %v742
        %v746 = vpop.xlane.xlu0 %745
        %v747 = vmax.f32 %v744, 0.0
        %v748 = vmax.f32 %v746, 0.0
        %v749 = vand.u32 2147483647, %v744
        %v750 = vand.u32 2147483647, %v746
        %v751 = vsub.f32 0.0, %v749
        %v752 = vsub.f32 0.0, %v750
        %v753 = vmul.f32 %v751, 1.442695
        %v754 = vpow.pop %v753
        %v755 = vmul.f32 %v752, 1.442695
        %v756 = vpow.pop %v755
        %v757 = vadd.f32 %v754, 1.0
        %v758 = vlog2.pop %v757
        %v759 = vmul.f32 %v758, 0.6931472
        %v760 = vmul.f32 -0.5, %v754
        %v761 = vadd.f32 %v760, 1.0
        %v762 = vmul.f32 %v761, %v754
        %v763 = vand.u32 2147483647, %v754
        %vm764 = vcmp.lt.f32.partialorder %v763, 0.0004427343
        %v765 = vsel %vm764, %v762, %v759
        %v766 = vadd.f32 %v756, 1.0
        %v767 = vlog2.pop %v766
        %v768 = vmul.f32 %v767, 0.6931472
        %v769 = vmul.f32 -0.5, %v756
        %v770 = vadd.f32 %v769, 1.0
        %v771 = vmul.f32 %v770, %v756
        %v772 = vand.u32 2147483647, %v756
        %vm773 = vcmp.lt.f32.partialorder %v772, 0.0004427343
        %v774 = vsel %vm773, %v771, %v768
        %v775 = vadd.f32 %v747, %v765
        %v776 = vadd.f32 %v748, %v774
        %v777 = vmul.f32 %v775, %v302
        %v778 = vmul.f32 %v776, %v303
        %v779 = vsel %vm344, %v777, 0.0
        %v780 = vsel %vm344, %v778, 0.0
        %v781 = vadd.f32 %v779, %v780
        %782 = vadd.xlane.f32.xlu0 %v781
        %v783 = vpop.xlane.xlu0 %782
        %v784 = vrot.slane %v783, 4
        %v785 = vadd.f32 %v783, %v784
        %v786 = vrot.slane %v785, 2
        %v787 = vadd.f32 %v785, %v786
        %v788 = vrot.slane %v787, 1
        %v789 = vadd.f32 %v787, %v788
        %s790 = vtos %v789
        %s791 = sadd.f32 %s682, %s790
        %v792 = vstv %s791
        %v793 = vadd.f32 %v792, 0.0
        %794 = vst [vmem:[%s176] sm:$0xff] %v793
        %s795 = sand.u32 %s89, 1
        %s796 = scalar_lea.sflag [#allocation11], %s795
        %s797 = sand.u32 %s89, 1
        %s798 = smul.addr %s797, 8
        %s799 = scalar_lea.vmem [#allocation14], %s798
        // Predicated region
        $region79: #{tpu_custom_call.1} parent=27 // pred_check
          %p800 = pneg %p99
        $region80: #{tpu_custom_call.1} parent=27 // pred_check_branch
          %802 = sbr.rel (%p800) target = $region82
        $region81: #{tpu_custom_call.1} parent=27 // pred_region
          %804 = vsyncadd %s796, 0
          %s805 = smul.addr %s39, 8
          %s806 = scalar_lea.hbm %s5, %s805
          %s808 = sshll.u32 %s799, 4
          %s809 = int_to_ptr.vmem [resolvable:$true] %s808
          %s810 = sshll.u32 %s806, 4
          %s811 = int_to_ptr.hbm [resolvable:$true] %s810
          %813 = dma.vmem_to_hbm [thread:$0]  %s809, 128, %s811, %s796
        $region82: #{tpu_custom_call.1} parent=27 // pred_fallthru
          _
      $region28: #{tpu_custom_call.1} parent=5 // pred_fallthru
        _
      %p814 = scmp.le.s32.totalorder 2, %s34
      // Predicated region
      $region83: #{tpu_custom_call.1} parent=5 // pred_check
        %p815 = pneg %p814
      $region84: #{tpu_custom_call.1} parent=5 // pred_check_branch
        %817 = sbr.rel (%p815) target = $region86
      $region85: #{tpu_custom_call.1} parent=5 // pred_region
        %s818 = ssub.s32 %s34, 2
        // Predicated region
        $region87: #{tpu_custom_call.1} parent=85 // pred_check
          %p819 = pneg %p105
        $region88: #{tpu_custom_call.1} parent=85 // pred_check_branch
          %821 = sbr.rel (%p819) target = $region90
        $region89: #{tpu_custom_call.1} parent=85 // pred_region
          %s822 = sand.u32 %s90, 1
          %s823 = scalar_lea.sflag [#allocation11], %s822
          %s824 = sand.u32 %s90, 1
          %s825 = smul.addr %s824, 8
          %s826 = scalar_lea.vmem [#allocation14], %s825
          %828 = dma.done %s823, 128
        $region90: #{tpu_custom_call.1} parent=85 // pred_fallthru
          _
      $region86: #{tpu_custom_call.1} parent=5 // pred_fallthru
        _
    $region6: #{tpu_custom_call.1} parent=1 // loop_footer
      %s38 = sadd.s32 1, %s34
    $region7: #{tpu_custom_call.1} parent=1 // loop_footer_branch
      %33 = sbr.rel target = $region3
    $region8: #{tpu_custom_call.1} parent=1 // loop_exit
      _
    %829 = vsyncpa [#allocation10], 1
    %s830 = scalar_lea.sflag [#allocation10], 1
    %831 = vsyncpa %s830, 1
    %832 = vsyncpa [#allocation13], 1
    %833 = vsyncpa [#allocation11], 1
    %s834 = scalar_lea.sflag [#allocation11], 1
    %835 = vsyncpa %s834, 1

</llo_original>
